<compile_context>
chip_gen: v7x
topology: tpu7x:2x2x1
jax: 0.10.0
libtpu: 0.0.40
codegen_flags: <defaults>
</compile_context>

<pallas_src>
import functools

import jax
import jax.numpy as jnp
from jax import lax
from jax.experimental import pallas as pl
from jax.experimental.pallas import tpu as pltpu


def _round_up(x, m):
    return (x + m - 1) // m * m


def _vmem_limit_bytes():
    """Per-chip VMEM budget: ~half the physical capacity (v5e/v6e 128 MiB ->
    64 MiB, v7x 64 MiB -> 32 MiB); falls back to 32 MiB if the query fails."""
    try:
        cap = int(getattr(pltpu.get_tpu_info(), "vmem_capacity_bytes", 0))
    except Exception:
        cap = 0
    if not cap:
        cap = 64 * 1024 * 1024
    return max(16 * 1024 * 1024, min(cap // 2, 64 * 1024 * 1024))


def _fused_conv_block_kernel(x_ref, mask_ref, w1_ref, b1_ref, w2_ref, b2_ref,
                             o_ref, mid_ref, patch_ref, *, wp, pad):
    """Two fused (conv3x3 + folded-BN + ReLU) stages for `nb` packed images.

    x_ref:     (nb, Cin_p,  L1)    flattened, spatially padded inputs
    mask_ref:  (1, nb*M1)          precomputed {0,1} wrap-column mask
    w1_ref:    (Cout_p, 9*Cin_p)   stage-1 weights (BN folded), tap-major K
    b1_ref:    (Cout_p, 1)         stage-1 bias    (BN folded)
    w2_ref:    (Cout_p, 9*Cout_p)  stage-2 weights (BN folded)
    b2_ref:    (Cout_p, 1)         stage-2 bias    (BN folded)
    o_ref:     (nb, Cout_p, M2)    flattened output slabs (lane-dense minor)
    mid_ref:   (nb, Cout_p, Lmid)  VMEM scratch: zero-padded stage-2 input
    patch_ref: (Kmax, nb*Mmax)     VMEM scratch: shared im2col patch
    """
    nb = x_ref.shape[0]
    cin = x_ref.shape[1]
    cmid = mid_ref.shape[1]
    lmid = mid_ref.shape[2]
    m2 = o_ref.shape[2]
    m1 = mask_ref.shape[1] // nb
    off = pad * wp + pad

    # ------------------------- stage 1 -------------------------
    # im2col: each 3x3 tap is a contiguous lane slice of the flattened image;
    # the nb images are packed side-by-side on the lane axis of the patch.
    for j in range(nb):
        for dy in range(3):
            for dx in range(3):
                t = dy * 3 + dx
                s = dy * wp + dx
                patch_ref[t * cin:(t + 1) * cin, j * m1:(j + 1) * m1] = (
                    x_ref[j, :, s:s + m1])
    act = jnp.dot(w1_ref[...], patch_ref[0:9 * cin, 0:nb * m1],
                  preferred_element_type=jnp.float32)     # (Cout_p, nb*M1)
    # bias + ReLU, then zero the wrap-around columns (precomputed mask);
    # the zeroed wrap columns double as the stage-2 left/right zero padding.
    act = jnp.maximum(act + b1_ref[...], 0.0) * mask_ref[...]

    # Stage-2 padded input stays in VMEM.  Only the halo slices are zeroed;
    # the interior [off, off+M1) is fully overwritten every step.
    for j in range(nb):
        if off > 0:
            mid_ref[j, :, 0:off] = jnp.zeros((cmid, off), jnp.float32)
        mid_ref[j, :, off:off + m1] = act[:, j * m1:(j + 1) * m1]
        tail = lmid - off - m1
        if tail > 0:
            mid_ref[j, :, off + m1:lmid] = jnp.zeros((cmid, tail), jnp.float32)

    # ------------------------- stage 2 -------------------------
    for j in range(nb):
        for dy in range(3):
            for dx in range(3):
                t = dy * 3 + dx
                s = dy * wp + dx
                patch_ref[t * cmid:(t + 1) * cmid, j * m2:(j + 1) * m2] = (
                    mid_ref[j, :, s:s + m2])
    act2 = jnp.dot(w2_ref[...], patch_ref[0:9 * cmid, 0:nb * m2],
                   preferred_element_type=jnp.float32)    # (Cout_p, nb*M2)
    act2 = jnp.maximum(act2 + b2_ref[...], 0.0)
    for j in range(nb):
        o_ref[j] = act2[:, j * m2:(j + 1) * m2].astype(o_ref.dtype)


def _fold_bn(gamma, beta, running_mean, running_var, eps=1e-5):
    scale = gamma / jnp.sqrt(running_var + eps)
    shift = beta - running_mean * scale
    return scale, shift


def _fold_conv_bn(w_oihw, bias, scale, shift, cin_p, cout_p):
    """Fold eval-mode BN into the conv and reshape to the kernel's K layout."""
    cout, cin = w_oihw.shape[:2]
    w = w_oihw * scale[:, None, None, None]            # w' = w * scale
    b = bias * scale + shift                            # b' = b*scale + shift
    # (Cout, Cin, 3, 3) -> (Cout, 3, 3, Cin): K index = (dy*3+dx)*Cin_p + ci
    w = jnp.transpose(w, (0, 2, 3, 1))
    w = jnp.pad(w, ((0, cout_p - cout), (0, 0), (0, 0), (0, cin_p - cin)))
    w2d = w.reshape(cout_p, 9 * cin_p)
    b2d = jnp.pad(b, (0, cout_p - cout)).reshape(cout_p, 1)
    return w2d, b2d


def unet_conv_block(x_nchw, params, padding):
    """Forward pass of UNetConvBlock (eval-mode BN). Input/output are NCHW."""
    (w1_oihw, b1, s1, t1), (w2_oihw, b2, s2, t2) = params
    N, cin, H, W = x_nchw.shape
    cout = w1_oihw.shape[0]
    p = int(padding)

    hp, wp = H + 2 * p, W + 2 * p
    ho1, wo1 = hp - 2, wp - 2                       # stage-1 output size
    ho2, wo2 = ho1 + 2 * p - 2, wo1 + 2 * p - 2     # stage-2 output size
    # The wrap-columns-as-padding trick needs at least 2 wrap columns.
    assert wp - wo1 >= 2, (wp, wo1)
    m1, m2 = ho1 * wp, ho2 * wp
    l1 = (hp + 1) * wp                              # +1 spare zero row (tails)
    lmid = (ho1 + 2 * p + 1) * wp

    # Pad channel counts up to the 8-sublane tile so patch writes stay aligned.
    cin_p = _round_up(cin, 8)
    cout_p = _round_up(cout, 8)

    # Batch packing: pack nb images per grid step onto the lane axis.  Keep
    # >= 2 grid steps (both TensorCores get work on multi-core chips) and cap
    # nb by a per-chip VMEM budget (input/output blocks double-buffered).
    vmem_limit = _vmem_limit_bytes()
    per_img_bytes = 4 * (2 * cin_p * l1 + 2 * cout_p * m2 + cout_p * lmid
                         + max(9 * cin_p, 9 * cout_p) * max(m1, m2) + m1)
    nb_cap = max(1, (vmem_limit // 2) // per_img_bytes)
    nb = int(min(max(1, N // 2), nb_cap))
    n_pad = int(pl.cdiv(N, nb)) * nb

    # Flattened, spatially padded input: (N_pad, Cin_p, (Hp+1)*Wp).
    xf = jnp.pad(x_nchw, ((0, n_pad - N), (0, cin_p - cin),
                          (p, p + 1), (p, p)))
    xf = xf.reshape(n_pad, cin_p, l1)

    # Precomputed loop-invariant wrap-column mask (review: no per-step iota).
    col = jnp.arange(m1, dtype=jnp.int32) % wp
    mask = jnp.tile((col < wo1).astype(jnp.float32), (nb,)).reshape(1, nb * m1)

    w1_2d, b1_2d = _fold_conv_bn(w1_oihw, b1, s1, t1, cin_p, cout_p)
    w2_2d, b2_2d = _fold_conv_bn(w2_oihw, b2, s2, t2, cout_p, cout_p)

    kernel = functools.partial(_fused_conv_block_kernel, wp=wp, pad=p)
    out_flat = pl.pallas_call(
        kernel,
        out_shape=jax.ShapeDtypeStruct((n_pad, cout_p, m2), x_nchw.dtype),
        grid_spec=pltpu.PrefetchScalarGridSpec(
            num_scalar_prefetch=0,
            grid=(n_pad // nb,),
            in_specs=[
                pl.BlockSpec((nb, cin_p, l1), lambda n: (n, 0, 0)),
                pl.BlockSpec((1, nb * m1), lambda n: (0, 0)),
                pl.BlockSpec((cout_p, 9 * cin_p), lambda n: (0, 0)),
                pl.BlockSpec((cout_p, 1), lambda n: (0, 0)),
                pl.BlockSpec((cout_p, 9 * cout_p), lambda n: (0, 0)),
                pl.BlockSpec((cout_p, 1), lambda n: (0, 0)),
            ],
            out_specs=pl.BlockSpec((nb, cout_p, m2), lambda n: (n, 0, 0)),
            scratch_shapes=[
                pltpu.VMEM((nb, cout_p, lmid), jnp.float32),   # stage-2 input
                # ONE shared im2col patch for both stages (used sequentially).
                pltpu.VMEM((max(9 * cin_p, 9 * cout_p), nb * max(m1, m2)),
                           jnp.float32),
            ],
        ),
        compiler_params=pltpu.CompilerParams(
            dimension_semantics=("parallel",),
            vmem_limit_bytes=vmem_limit),
    )(xf, mask, w1_2d, b1_2d, w2_2d, b2_2d)

    # Strip batch/channel padding and wrap-around columns -> NCHW output.
    # NOTE: in a full UNet the consumer should read the (Cout_p, Ho2, Wp)
    # slab directly (lazy strided view) to avoid this extra HBM pass.
    out = out_flat.reshape(n_pad, cout_p, ho2, wp)[:N, :cout, :, :wo2]
    return out


def _make_params(key, in_size, out_size):
    """Deterministic params for one (Conv2d, BatchNorm2d) pair (eval mode)."""
    kw, kb = jax.random.split(key)
    w_oihw = jax.random.normal(kw, (out_size, in_size, 3, 3), jnp.float32) * 0.1
    bias = jax.random.normal(kb, (out_size,), jnp.float32) * 0.05
    gamma = 1.0 + 0.01 * jnp.arange(out_size, dtype=jnp.float32)
    beta = 0.02 * jnp.arange(out_size, dtype=jnp.float32)
    running_mean = 0.1 * jnp.ones((out_size,), jnp.float32)
    running_var = jnp.ones((out_size,), jnp.float32)
    scale, shift = _fold_bn(gamma, beta, running_mean, running_var)
    return (w_oihw, bias, scale, shift)


def _reference(x_nchw, torch_params, padding):
    """Pure-JAX reference (lax.conv) for correctness checking."""
    x = x_nchw
    for (w_oihw, bias, scale, shift) in torch_params:
        x = lax.conv_general_dilated(
            x, w_oihw, window_strides=(1, 1),
            padding=[(padding, padding)] * 2,
            dimension_numbers=("NCHW", "OIHW", "NCHW"))
        x = x + bias[None, :, None, None]
        x = x * scale[None, :, None, None] + shift[None, :, None, None]
        x = jnp.maximum(x, 0.0)
    return x


if __name__ == "__main__":
    in_size, out_size = 4, 8
    padding = True            # -> int(True) == 1, spatial size preserved
    N, H, W = 4, 16, 16       # N=4 exercises batch packing (nb=2, 2 grid steps)

    key = jax.random.PRNGKey(0)
    kx, k1, k2 = jax.random.split(key, 3)
    x = jax.random.normal(kx, (N, in_size, H, W), jnp.float32)

    p1 = _make_params(k1, in_size, out_size)
    p2 = _make_params(k2, out_size, out_size)

    out = unet_conv_block(x, (p1, p2), int(padding))
    out = jax.block_until_ready(out)

    ref = _reference(x, [p1, p2], int(padding))
    assert out.shape == (N, out_size, H, W), out.shape
    err = float(jnp.max(jnp.abs(out - ref)))
    assert jnp.allclose(out, ref, atol=2e-4, rtol=2e-4), err

    print("KERNEL_OK")
</pallas_src>

<mosaic_0001>
module attributes {stable_mosaic.version = 11 : i64} {
  func.func @_fused_conv_block_kernel(%arg0: i32, %arg1: memref<2x8x342xf32, #tpu.memory_space<vmem>>, %arg2: memref<1x576xf32, #tpu.memory_space<vmem>>, %arg3: memref<8x72xf32, #tpu.memory_space<vmem>>, %arg4: memref<8x1xf32, #tpu.memory_space<vmem>>, %arg5: memref<8x72xf32, #tpu.memory_space<vmem>>, %arg6: memref<8x1xf32, #tpu.memory_space<vmem>>, %arg7: memref<2x8x288xf32, #tpu.memory_space<vmem>>, %arg8: memref<2x8x342xf32, #tpu.memory_space<vmem>>, %arg9: memref<72x576xf32, #tpu.memory_space<vmem>>) attributes {dimension_semantics = [#tpu.dimension_semantics<parallel>], iteration_bounds = array<i64: 2>, scalar_prefetch = 0 : i64, scratch_operands = 2 : i64, tpu.core_type = #tpu.core_type<tc>, window_params = [{transform_indices = @transform_0, window_bounds = array<i64: 2, 8, 342>}, {pipeline_mode = #tpu.pipeline_mode<synchronous>, transform_indices = @transform_1, window_bounds = array<i64: 1, 576>}, {pipeline_mode = #tpu.pipeline_mode<synchronous>, transform_indices = @transform_2, window_bounds = array<i64: 8, 72>}, {pipeline_mode = #tpu.pipeline_mode<synchronous>, transform_indices = @transform_3, window_bounds = array<i64: 8, 1>}, {pipeline_mode = #tpu.pipeline_mode<synchronous>, transform_indices = @transform_4, window_bounds = array<i64: 8, 72>}, {pipeline_mode = #tpu.pipeline_mode<synchronous>, transform_indices = @transform_5, window_bounds = array<i64: 8, 1>}, {transform_indices = @transform_6, window_bounds = array<i64: 2, 8, 288>}]} {
    %c0 = arith.constant 0 : index
    %c0_0 = arith.constant 0 : index
    %c0_1 = arith.constant 0 : index
    %0 = vector.load %arg1[%c0, %c0_0, %c0_1] : memref<2x8x342xf32, #tpu.memory_space<vmem>>, vector<1x8x288xf32>
    %1 = vector.shape_cast %0 : vector<1x8x288xf32> to vector<8x288xf32>
    %c0_2 = arith.constant 0 : index
    %c0_3 = arith.constant 0 : index
    %2 = vector.load %arg9[%c0_2, %c0_3] : memref<72x576xf32, #tpu.memory_space<vmem>>, vector<8x288xf32>
    tpu.vector_store %arg9[%c0_2, %c0_3], %1 {strides = array<i32>} : memref<72x576xf32, #tpu.memory_space<vmem>>, vector<8x288xf32>,
    %c0_4 = arith.constant 0 : index
    %c0_5 = arith.constant 0 : index
    %c1 = arith.constant 1 : index
    %3 = vector.load %arg1[%c0_4, %c0_5, %c1] : memref<2x8x342xf32, #tpu.memory_space<vmem>>, vector<1x8x288xf32>
    %4 = vector.shape_cast %3 : vector<1x8x288xf32> to vector<8x288xf32>
    %c8 = arith.constant 8 : index
    %c0_6 = arith.constant 0 : index
    %5 = vector.load %arg9[%c8, %c0_6] : memref<72x576xf32, #tpu.memory_space<vmem>>, vector<8x288xf32>
    tpu.vector_store %arg9[%c8, %c0_6], %4 {strides = array<i32>} : memref<72x576xf32, #tpu.memory_space<vmem>>, vector<8x288xf32>,
    %c0_7 = arith.constant 0 : index
    %c0_8 = arith.constant 0 : index
    %c2 = arith.constant 2 : index
    %6 = vector.load %arg1[%c0_7, %c0_8, %c2] : memref<2x8x342xf32, #tpu.memory_space<vmem>>, vector<1x8x288xf32>
    %7 = vector.shape_cast %6 : vector<1x8x288xf32> to vector<8x288xf32>
    %c16 = arith.constant 16 : index
    %c0_9 = arith.constant 0 : index
    %8 = vector.load %arg9[%c16, %c0_9] : memref<72x576xf32, #tpu.memory_space<vmem>>, vector<8x288xf32>
    tpu.vector_store %arg9[%c16, %c0_9], %7 {strides = array<i32>} : memref<72x576xf32, #tpu.memory_space<vmem>>, vector<8x288xf32>,
    %c0_10 = arith.constant 0 : index
    %c0_11 = arith.constant 0 : index
    %c18 = arith.constant 18 : index
    %9 = vector.load %arg1[%c0_10, %c0_11, %c18] : memref<2x8x342xf32, #tpu.memory_space<vmem>>, vector<1x8x288xf32>
    %10 = vector.shape_cast %9 : vector<1x8x288xf32> to vector<8x288xf32>
    %c24 = arith.constant 24 : index
    %c0_12 = arith.constant 0 : index
    %11 = vector.load %arg9[%c24, %c0_12] : memref<72x576xf32, #tpu.memory_space<vmem>>, vector<8x288xf32>
    tpu.vector_store %arg9[%c24, %c0_12], %10 {strides = array<i32>} : memref<72x576xf32, #tpu.memory_space<vmem>>, vector<8x288xf32>,
    %c0_13 = arith.constant 0 : index
    %c0_14 = arith.constant 0 : index
    %c19 = arith.constant 19 : index
    %12 = vector.load %arg1[%c0_13, %c0_14, %c19] : memref<2x8x342xf32, #tpu.memory_space<vmem>>, vector<1x8x288xf32>
    %13 = vector.shape_cast %12 : vector<1x8x288xf32> to vector<8x288xf32>
    %c32 = arith.constant 32 : index
    %c0_15 = arith.constant 0 : index
    %14 = vector.load %arg9[%c32, %c0_15] : memref<72x576xf32, #tpu.memory_space<vmem>>, vector<8x288xf32>
    tpu.vector_store %arg9[%c32, %c0_15], %13 {strides = array<i32>} : memref<72x576xf32, #tpu.memory_space<vmem>>, vector<8x288xf32>,
    %c0_16 = arith.constant 0 : index
    %c0_17 = arith.constant 0 : index
    %c20 = arith.constant 20 : index
    %15 = vector.load %arg1[%c0_16, %c0_17, %c20] : memref<2x8x342xf32, #tpu.memory_space<vmem>>, vector<1x8x288xf32>
    %16 = vector.shape_cast %15 : vector<1x8x288xf32> to vector<8x288xf32>
    %c40 = arith.constant 40 : index
    %c0_18 = arith.constant 0 : index
    %17 = vector.load %arg9[%c40, %c0_18] : memref<72x576xf32, #tpu.memory_space<vmem>>, vector<8x288xf32>
    tpu.vector_store %arg9[%c40, %c0_18], %16 {strides = array<i32>} : memref<72x576xf32, #tpu.memory_space<vmem>>, vector<8x288xf32>,
    %c0_19 = arith.constant 0 : index
    %c0_20 = arith.constant 0 : index
    %c36 = arith.constant 36 : index
    %18 = vector.load %arg1[%c0_19, %c0_20, %c36] : memref<2x8x342xf32, #tpu.memory_space<vmem>>, vector<1x8x288xf32>
    %19 = vector.shape_cast %18 : vector<1x8x288xf32> to vector<8x288xf32>
    %c48 = arith.constant 48 : index
    %c0_21 = arith.constant 0 : index
    %20 = vector.load %arg9[%c48, %c0_21] : memref<72x576xf32, #tpu.memory_space<vmem>>, vector<8x288xf32>
    tpu.vector_store %arg9[%c48, %c0_21], %19 {strides = array<i32>} : memref<72x576xf32, #tpu.memory_space<vmem>>, vector<8x288xf32>,
    %c0_22 = arith.constant 0 : index
    %c0_23 = arith.constant 0 : index
    %c37 = arith.constant 37 : index
    %21 = vector.load %arg1[%c0_22, %c0_23, %c37] : memref<2x8x342xf32, #tpu.memory_space<vmem>>, vector<1x8x288xf32>
    %22 = vector.shape_cast %21 : vector<1x8x288xf32> to vector<8x288xf32>
    %c56 = arith.constant 56 : index
    %c0_24 = arith.constant 0 : index
    %23 = vector.load %arg9[%c56, %c0_24] : memref<72x576xf32, #tpu.memory_space<vmem>>, vector<8x288xf32>
    tpu.vector_store %arg9[%c56, %c0_24], %22 {strides = array<i32>} : memref<72x576xf32, #tpu.memory_space<vmem>>, vector<8x288xf32>,
    %c0_25 = arith.constant 0 : index
    %c0_26 = arith.constant 0 : index
    %c38 = arith.constant 38 : index
    %24 = vector.load %arg1[%c0_25, %c0_26, %c38] : memref<2x8x342xf32, #tpu.memory_space<vmem>>, vector<1x8x288xf32>
    %25 = vector.shape_cast %24 : vector<1x8x288xf32> to vector<8x288xf32>
    %c64 = arith.constant 64 : index
    %c0_27 = arith.constant 0 : index
    %26 = vector.load %arg9[%c64, %c0_27] : memref<72x576xf32, #tpu.memory_space<vmem>>, vector<8x288xf32>
    tpu.vector_store %arg9[%c64, %c0_27], %25 {strides = array<i32>} : memref<72x576xf32, #tpu.memory_space<vmem>>, vector<8x288xf32>,
    %c1_28 = arith.constant 1 : index
    %c0_29 = arith.constant 0 : index
    %c0_30 = arith.constant 0 : index
    %27 = vector.load %arg1[%c1_28, %c0_29, %c0_30] : memref<2x8x342xf32, #tpu.memory_space<vmem>>, vector<1x8x288xf32>
    %28 = vector.shape_cast %27 : vector<1x8x288xf32> to vector<8x288xf32>
    %c0_31 = arith.constant 0 : index
    %c288 = arith.constant 288 : index
    %29 = vector.load %arg9[%c0_31, %c288] : memref<72x576xf32, #tpu.memory_space<vmem>>, vector<8x288xf32>
    tpu.vector_store %arg9[%c0_31, %c288], %28 {strides = array<i32>} : memref<72x576xf32, #tpu.memory_space<vmem>>, vector<8x288xf32>,
    %c1_32 = arith.constant 1 : index
    %c0_33 = arith.constant 0 : index
    %c1_34 = arith.constant 1 : index
    %30 = vector.load %arg1[%c1_32, %c0_33, %c1_34] : memref<2x8x342xf32, #tpu.memory_space<vmem>>, vector<1x8x288xf32>
    %31 = vector.shape_cast %30 : vector<1x8x288xf32> to vector<8x288xf32>
    %c8_35 = arith.constant 8 : index
    %c288_36 = arith.constant 288 : index
    %32 = vector.load %arg9[%c8_35, %c288_36] : memref<72x576xf32, #tpu.memory_space<vmem>>, vector<8x288xf32>
    tpu.vector_store %arg9[%c8_35, %c288_36], %31 {strides = array<i32>} : memref<72x576xf32, #tpu.memory_space<vmem>>, vector<8x288xf32>,
    %c1_37 = arith.constant 1 : index
    %c0_38 = arith.constant 0 : index
    %c2_39 = arith.constant 2 : index
    %33 = vector.load %arg1[%c1_37, %c0_38, %c2_39] : memref<2x8x342xf32, #tpu.memory_space<vmem>>, vector<1x8x288xf32>
    %34 = vector.shape_cast %33 : vector<1x8x288xf32> to vector<8x288xf32>
    %c16_40 = arith.constant 16 : index
    %c288_41 = arith.constant 288 : index
    %35 = vector.load %arg9[%c16_40, %c288_41] : memref<72x576xf32, #tpu.memory_space<vmem>>, vector<8x288xf32>
    tpu.vector_store %arg9[%c16_40, %c288_41], %34 {strides = array<i32>} : memref<72x576xf32, #tpu.memory_space<vmem>>, vector<8x288xf32>,
    %c1_42 = arith.constant 1 : index
    %c0_43 = arith.constant 0 : index
    %c18_44 = arith.constant 18 : index
    %36 = vector.load %arg1[%c1_42, %c0_43, %c18_44] : memref<2x8x342xf32, #tpu.memory_space<vmem>>, vector<1x8x288xf32>
    %37 = vector.shape_cast %36 : vector<1x8x288xf32> to vector<8x288xf32>
    %c24_45 = arith.constant 24 : index
    %c288_46 = arith.constant 288 : index
    %38 = vector.load %arg9[%c24_45, %c288_46] : memref<72x576xf32, #tpu.memory_space<vmem>>, vector<8x288xf32>
    tpu.vector_store %arg9[%c24_45, %c288_46], %37 {strides = array<i32>} : memref<72x576xf32, #tpu.memory_space<vmem>>, vector<8x288xf32>,
    %c1_47 = arith.constant 1 : index
    %c0_48 = arith.constant 0 : index
    %c19_49 = arith.constant 19 : index
    %39 = vector.load %arg1[%c1_47, %c0_48, %c19_49] : memref<2x8x342xf32, #tpu.memory_space<vmem>>, vector<1x8x288xf32>
    %40 = vector.shape_cast %39 : vector<1x8x288xf32> to vector<8x288xf32>
    %c32_50 = arith.constant 32 : index
    %c288_51 = arith.constant 288 : index
    %41 = vector.load %arg9[%c32_50, %c288_51] : memref<72x576xf32, #tpu.memory_space<vmem>>, vector<8x288xf32>
    tpu.vector_store %arg9[%c32_50, %c288_51], %40 {strides = array<i32>} : memref<72x576xf32, #tpu.memory_space<vmem>>, vector<8x288xf32>,
    %c1_52 = arith.constant 1 : index
    %c0_53 = arith.constant 0 : index
    %c20_54 = arith.constant 20 : index
    %42 = vector.load %arg1[%c1_52, %c0_53, %c20_54] : memref<2x8x342xf32, #tpu.memory_space<vmem>>, vector<1x8x288xf32>
    %43 = vector.shape_cast %42 : vector<1x8x288xf32> to vector<8x288xf32>
    %c40_55 = arith.constant 40 : index
    %c288_56 = arith.constant 288 : index
    %44 = vector.load %arg9[%c40_55, %c288_56] : memref<72x576xf32, #tpu.memory_space<vmem>>, vector<8x288xf32>
    tpu.vector_store %arg9[%c40_55, %c288_56], %43 {strides = array<i32>} : memref<72x576xf32, #tpu.memory_space<vmem>>, vector<8x288xf32>,
    %c1_57 = arith.constant 1 : index
    %c0_58 = arith.constant 0 : index
    %c36_59 = arith.constant 36 : index
    %45 = vector.load %arg1[%c1_57, %c0_58, %c36_59] : memref<2x8x342xf32, #tpu.memory_space<vmem>>, vector<1x8x288xf32>
    %46 = vector.shape_cast %45 : vector<1x8x288xf32> to vector<8x288xf32>
    %c48_60 = arith.constant 48 : index
    %c288_61 = arith.constant 288 : index
    %47 = vector.load %arg9[%c48_60, %c288_61] : memref<72x576xf32, #tpu.memory_space<vmem>>, vector<8x288xf32>
    tpu.vector_store %arg9[%c48_60, %c288_61], %46 {strides = array<i32>} : memref<72x576xf32, #tpu.memory_space<vmem>>, vector<8x288xf32>,
    %c1_62 = arith.constant 1 : index
    %c0_63 = arith.constant 0 : index
    %c37_64 = arith.constant 37 : index
    %48 = vector.load %arg1[%c1_62, %c0_63, %c37_64] : memref<2x8x342xf32, #tpu.memory_space<vmem>>, vector<1x8x288xf32>
    %49 = vector.shape_cast %48 : vector<1x8x288xf32> to vector<8x288xf32>
    %c56_65 = arith.constant 56 : index
    %c288_66 = arith.constant 288 : index
    %50 = vector.load %arg9[%c56_65, %c288_66] : memref<72x576xf32, #tpu.memory_space<vmem>>, vector<8x288xf32>
    tpu.vector_store %arg9[%c56_65, %c288_66], %49 {strides = array<i32>} : memref<72x576xf32, #tpu.memory_space<vmem>>, vector<8x288xf32>,
    %c1_67 = arith.constant 1 : index
    %c0_68 = arith.constant 0 : index
    %c38_69 = arith.constant 38 : index
    %51 = vector.load %arg1[%c1_67, %c0_68, %c38_69] : memref<2x8x342xf32, #tpu.memory_space<vmem>>, vector<1x8x288xf32>
    %52 = vector.shape_cast %51 : vector<1x8x288xf32> to vector<8x288xf32>
    %c64_70 = arith.constant 64 : index
    %c288_71 = arith.constant 288 : index
    %53 = vector.load %arg9[%c64_70, %c288_71] : memref<72x576xf32, #tpu.memory_space<vmem>>, vector<8x288xf32>
    tpu.vector_store %arg9[%c64_70, %c288_71], %52 {strides = array<i32>} : memref<72x576xf32, #tpu.memory_space<vmem>>, vector<8x288xf32>,
    %c0_72 = arith.constant 0 : index
    %c0_73 = arith.constant 0 : index
    %54 = vector.load %arg3[%c0_72, %c0_73] : memref<8x72xf32, #tpu.memory_space<vmem>>, vector<8x72xf32>
    %c0_74 = arith.constant 0 : index
    %c0_75 = arith.constant 0 : index
    %55 = vector.load %arg9[%c0_74, %c0_75] : memref<72x576xf32, #tpu.memory_space<vmem>>, vector<72x576xf32>
    %cst = arith.constant dense<0.000000e+00> : vector<8x576xf32>
    %56 = tpu.matmul %54, %55, %cst {dimension_numbers = #tpu.dot_dimension_numbers<[1], [0], [0], [1], [0, 0, 1, 1], [], []>} : vector<8x72xf32>, vector<72x576xf32>, vector<8x576xf32> -> vector<8x576xf32>
    %c0_76 = arith.constant 0 : index
    %c0_77 = arith.constant 0 : index
    %57 = vector.load %arg4[%c0_76, %c0_77] : memref<8x1xf32, #tpu.memory_space<vmem>>, vector<8x1xf32>
    %58 = vector.broadcast %57 : vector<8x1xf32> to vector<8x576xf32>
    %59 = arith.addf %56, %58 : vector<8x576xf32>
    %cst_78 = arith.constant 0.000000e+00 : f32
    %60 = vector.broadcast %cst_78 : f32 to vector<8x576xf32>
    %61 = arith.maximumf %59, %60 : vector<8x576xf32>
    %c0_79 = arith.constant 0 : index
    %c0_80 = arith.constant 0 : index
    %62 = vector.load %arg2[%c0_79, %c0_80] : memref<1x576xf32, #tpu.memory_space<vmem>>, vector<1x576xf32>
    %63 = vector.broadcast %62 : vector<1x576xf32> to vector<8x576xf32>
    %64 = arith.mulf %61, %63 : vector<8x576xf32>
    %cst_81 = arith.constant 0.000000e+00 : f32
    %65 = vector.broadcast %cst_81 : f32 to vector<8x19xf32>
    %c0_82 = arith.constant 0 : index
    %c0_83 = arith.constant 0 : index
    %c0_84 = arith.constant 0 : index
    %66 = vector.load %arg8[%c0_82, %c0_83, %c0_84] : memref<2x8x342xf32, #tpu.memory_space<vmem>>, vector<1x8x19xf32>
    %67 = vector.shape_cast %66 : vector<1x8x19xf32> to vector<8x19xf32>
    %68 = vector.shape_cast %65 : vector<8x19xf32> to vector<1x8x19xf32>
    tpu.vector_store %arg8[%c0_82, %c0_83, %c0_84], %68 {strides = array<i32>} : memref<2x8x342xf32, #tpu.memory_space<vmem>>, vector<1x8x19xf32>,
    %69 = vector.extract_strided_slice %64 {offsets = [0, 0], sizes = [8, 288], strides = [1, 1]} : vector<8x576xf32> to vector<8x288xf32>
    %c0_85 = arith.constant 0 : index
    %c0_86 = arith.constant 0 : index
    %c19_87 = arith.constant 19 : index
    %70 = vector.load %arg8[%c0_85, %c0_86, %c19_87] : memref<2x8x342xf32, #tpu.memory_space<vmem>>, vector<1x8x288xf32>
    %71 = vector.shape_cast %70 : vector<1x8x288xf32> to vector<8x288xf32>
    %72 = vector.shape_cast %69 : vector<8x288xf32> to vector<1x8x288xf32>
    tpu.vector_store %arg8[%c0_85, %c0_86, %c19_87], %72 {strides = array<i32>} : memref<2x8x342xf32, #tpu.memory_space<vmem>>, vector<1x8x288xf32>,
    %cst_88 = arith.constant 0.000000e+00 : f32
    %73 = vector.broadcast %cst_88 : f32 to vector<8x35xf32>
    %c0_89 = arith.constant 0 : index
    %c0_90 = arith.constant 0 : index
    %c307 = arith.constant 307 : index
    %74 = vector.load %arg8[%c0_89, %c0_90, %c307] : memref<2x8x342xf32, #tpu.memory_space<vmem>>, vector<1x8x35xf32>
    %75 = vector.shape_cast %74 : vector<1x8x35xf32> to vector<8x35xf32>
    %76 = vector.shape_cast %73 : vector<8x35xf32> to vector<1x8x35xf32>
    tpu.vector_store %arg8[%c0_89, %c0_90, %c307], %76 {strides = array<i32>} : memref<2x8x342xf32, #tpu.memory_space<vmem>>, vector<1x8x35xf32>,
    %cst_91 = arith.constant 0.000000e+00 : f32
    %77 = vector.broadcast %cst_91 : f32 to vector<8x19xf32>
    %c1_92 = arith.constant 1 : index
    %c0_93 = arith.constant 0 : index
    %c0_94 = arith.constant 0 : index
    %78 = vector.load %arg8[%c1_92, %c0_93, %c0_94] : memref<2x8x342xf32, #tpu.memory_space<vmem>>, vector<1x8x19xf32>
    %79 = vector.shape_cast %78 : vector<1x8x19xf32> to vector<8x19xf32>
    %80 = vector.shape_cast %77 : vector<8x19xf32> to vector<1x8x19xf32>
    tpu.vector_store %arg8[%c1_92, %c0_93, %c0_94], %80 {strides = array<i32>} : memref<2x8x342xf32, #tpu.memory_space<vmem>>, vector<1x8x19xf32>,
    %81 = vector.extract_strided_slice %64 {offsets = [0, 288], sizes = [8, 288], strides = [1, 1]} : vector<8x576xf32> to vector<8x288xf32>
    %c1_95 = arith.constant 1 : index
    %c0_96 = arith.constant 0 : index
    %c19_97 = arith.constant 19 : index
    %82 = vector.load %arg8[%c1_95, %c0_96, %c19_97] : memref<2x8x342xf32, #tpu.memory_space<vmem>>, vector<1x8x288xf32>
    %83 = vector.shape_cast %82 : vector<1x8x288xf32> to vector<8x288xf32>
    %84 = vector.shape_cast %81 : vector<8x288xf32> to vector<1x8x288xf32>
    tpu.vector_store %arg8[%c1_95, %c0_96, %c19_97], %84 {strides = array<i32>} : memref<2x8x342xf32, #tpu.memory_space<vmem>>, vector<1x8x288xf32>,
    %cst_98 = arith.constant 0.000000e+00 : f32
    %85 = vector.broadcast %cst_98 : f32 to vector<8x35xf32>
    %c1_99 = arith.constant 1 : index
    %c0_100 = arith.constant 0 : index
    %c307_101 = arith.constant 307 : index
    %86 = vector.load %arg8[%c1_99, %c0_100, %c307_101] : memref<2x8x342xf32, #tpu.memory_space<vmem>>, vector<1x8x35xf32>
    %87 = vector.shape_cast %86 : vector<1x8x35xf32> to vector<8x35xf32>
    %88 = vector.shape_cast %85 : vector<8x35xf32> to vector<1x8x35xf32>
    tpu.vector_store %arg8[%c1_99, %c0_100, %c307_101], %88 {strides = array<i32>} : memref<2x8x342xf32, #tpu.memory_space<vmem>>, vector<1x8x35xf32>,
    %c0_102 = arith.constant 0 : index
    %c0_103 = arith.constant 0 : index
    %c0_104 = arith.constant 0 : index
    %89 = vector.load %arg8[%c0_102, %c0_103, %c0_104] : memref<2x8x342xf32, #tpu.memory_space<vmem>>, vector<1x8x288xf32>
    %90 = vector.shape_cast %89 : vector<1x8x288xf32> to vector<8x288xf32>
    %c0_105 = arith.constant 0 : index
    %c0_106 = arith.constant 0 : index
    %91 = vector.load %arg9[%c0_105, %c0_106] : memref<72x576xf32, #tpu.memory_space<vmem>>, vector<8x288xf32>
    tpu.vector_store %arg9[%c0_105, %c0_106], %90 {strides = array<i32>} : memref<72x576xf32, #tpu.memory_space<vmem>>, vector<8x288xf32>,
    %c0_107 = arith.constant 0 : index
    %c0_108 = arith.constant 0 : index
    %c1_109 = arith.constant 1 : index
    %92 = vector.load %arg8[%c0_107, %c0_108, %c1_109] : memref<2x8x342xf32, #tpu.memory_space<vmem>>, vector<1x8x288xf32>
    %93 = vector.shape_cast %92 : vector<1x8x288xf32> to vector<8x288xf32>
    %c8_110 = arith.constant 8 : index
    %c0_111 = arith.constant 0 : index
    %94 = vector.load %arg9[%c8_110, %c0_111] : memref<72x576xf32, #tpu.memory_space<vmem>>, vector<8x288xf32>
    tpu.vector_store %arg9[%c8_110, %c0_111], %93 {strides = array<i32>} : memref<72x576xf32, #tpu.memory_space<vmem>>, vector<8x288xf32>,
    %c0_112 = arith.constant 0 : index
    %c0_113 = arith.constant 0 : index
    %c2_114 = arith.constant 2 : index
    %95 = vector.load %arg8[%c0_112, %c0_113, %c2_114] : memref<2x8x342xf32, #tpu.memory_space<vmem>>, vector<1x8x288xf32>
    %96 = vector.shape_cast %95 : vector<1x8x288xf32> to vector<8x288xf32>
    %c16_115 = arith.constant 16 : index
    %c0_116 = arith.constant 0 : index
    %97 = vector.load %arg9[%c16_115, %c0_116] : memref<72x576xf32, #tpu.memory_space<vmem>>, vector<8x288xf32>
    tpu.vector_store %arg9[%c16_115, %c0_116], %96 {strides = array<i32>} : memref<72x576xf32, #tpu.memory_space<vmem>>, vector<8x288xf32>,
    %c0_117 = arith.constant 0 : index
    %c0_118 = arith.constant 0 : index
    %c18_119 = arith.constant 18 : index
    %98 = vector.load %arg8[%c0_117, %c0_118, %c18_119] : memref<2x8x342xf32, #tpu.memory_space<vmem>>, vector<1x8x288xf32>
    %99 = vector.shape_cast %98 : vector<1x8x288xf32> to vector<8x288xf32>
    %c24_120 = arith.constant 24 : index
    %c0_121 = arith.constant 0 : index
    %100 = vector.load %arg9[%c24_120, %c0_121] : memref<72x576xf32, #tpu.memory_space<vmem>>, vector<8x288xf32>
    tpu.vector_store %arg9[%c24_120, %c0_121], %99 {strides = array<i32>} : memref<72x576xf32, #tpu.memory_space<vmem>>, vector<8x288xf32>,
    %c0_122 = arith.constant 0 : index
    %c0_123 = arith.constant 0 : index
    %c19_124 = arith.constant 19 : index
    %101 = vector.load %arg8[%c0_122, %c0_123, %c19_124] : memref<2x8x342xf32, #tpu.memory_space<vmem>>, vector<1x8x288xf32>
    %102 = vector.shape_cast %101 : vector<1x8x288xf32> to vector<8x288xf32>
    %c32_125 = arith.constant 32 : index
    %c0_126 = arith.constant 0 : index
    %103 = vector.load %arg9[%c32_125, %c0_126] : memref<72x576xf32, #tpu.memory_space<vmem>>, vector<8x288xf32>
    tpu.vector_store %arg9[%c32_125, %c0_126], %102 {strides = array<i32>} : memref<72x576xf32, #tpu.memory_space<vmem>>, vector<8x288xf32>,
    %c0_127 = arith.constant 0 : index
    %c0_128 = arith.constant 0 : index
    %c20_129 = arith.constant 20 : index
    %104 = vector.load %arg8[%c0_127, %c0_128, %c20_129] : memref<2x8x342xf32, #tpu.memory_space<vmem>>, vector<1x8x288xf32>
    %105 = vector.shape_cast %104 : vector<1x8x288xf32> to vector<8x288xf32>
    %c40_130 = arith.constant 40 : index
    %c0_131 = arith.constant 0 : index
    %106 = vector.load %arg9[%c40_130, %c0_131] : memref<72x576xf32, #tpu.memory_space<vmem>>, vector<8x288xf32>
    tpu.vector_store %arg9[%c40_130, %c0_131], %105 {strides = array<i32>} : memref<72x576xf32, #tpu.memory_space<vmem>>, vector<8x288xf32>,
    %c0_132 = arith.constant 0 : index
    %c0_133 = arith.constant 0 : index
    %c36_134 = arith.constant 36 : index
    %107 = vector.load %arg8[%c0_132, %c0_133, %c36_134] : memref<2x8x342xf32, #tpu.memory_space<vmem>>, vector<1x8x288xf32>
    %108 = vector.shape_cast %107 : vector<1x8x288xf32> to vector<8x288xf32>
    %c48_135 = arith.constant 48 : index
    %c0_136 = arith.constant 0 : index
    %109 = vector.load %arg9[%c48_135, %c0_136] : memref<72x576xf32, #tpu.memory_space<vmem>>, vector<8x288xf32>
    tpu.vector_store %arg9[%c48_135, %c0_136], %108 {strides = array<i32>} : memref<72x576xf32, #tpu.memory_space<vmem>>, vector<8x288xf32>,
    %c0_137 = arith.constant 0 : index
    %c0_138 = arith.constant 0 : index
    %c37_139 = arith.constant 37 : index
    %110 = vector.load %arg8[%c0_137, %c0_138, %c37_139] : memref<2x8x342xf32, #tpu.memory_space<vmem>>, vector<1x8x288xf32>
    %111 = vector.shape_cast %110 : vector<1x8x288xf32> to vector<8x288xf32>
    %c56_140 = arith.constant 56 : index
    %c0_141 = arith.constant 0 : index
    %112 = vector.load %arg9[%c56_140, %c0_141] : memref<72x576xf32, #tpu.memory_space<vmem>>, vector<8x288xf32>
    tpu.vector_store %arg9[%c56_140, %c0_141], %111 {strides = array<i32>} : memref<72x576xf32, #tpu.memory_space<vmem>>, vector<8x288xf32>,
    %c0_142 = arith.constant 0 : index
    %c0_143 = arith.constant 0 : index
    %c38_144 = arith.constant 38 : index
    %113 = vector.load %arg8[%c0_142, %c0_143, %c38_144] : memref<2x8x342xf32, #tpu.memory_space<vmem>>, vector<1x8x288xf32>
    %114 = vector.shape_cast %113 : vector<1x8x288xf32> to vector<8x288xf32>
    %c64_145 = arith.constant 64 : index
    %c0_146 = arith.constant 0 : index
    %115 = vector.load %arg9[%c64_145, %c0_146] : memref<72x576xf32, #tpu.memory_space<vmem>>, vector<8x288xf32>
    tpu.vector_store %arg9[%c64_145, %c0_146], %114 {strides = array<i32>} : memref<72x576xf32, #tpu.memory_space<vmem>>, vector<8x288xf32>,
    %c1_147 = arith.constant 1 : index
    %c0_148 = arith.constant 0 : index
    %c0_149 = arith.constant 0 : index
    %116 = vector.load %arg8[%c1_147, %c0_148, %c0_149] : memref<2x8x342xf32, #tpu.memory_space<vmem>>, vector<1x8x288xf32>
    %117 = vector.shape_cast %116 : vector<1x8x288xf32> to vector<8x288xf32>
    %c0_150 = arith.constant 0 : index
    %c288_151 = arith.constant 288 : index
    %118 = vector.load %arg9[%c0_150, %c288_151] : memref<72x576xf32, #tpu.memory_space<vmem>>, vector<8x288xf32>
    tpu.vector_store %arg9[%c0_150, %c288_151], %117 {strides = array<i32>} : memref<72x576xf32, #tpu.memory_space<vmem>>, vector<8x288xf32>,
    %c1_152 = arith.constant 1 : index
    %c0_153 = arith.constant 0 : index
    %c1_154 = arith.constant 1 : index
    %119 = vector.load %arg8[%c1_152, %c0_153, %c1_154] : memref<2x8x342xf32, #tpu.memory_space<vmem>>, vector<1x8x288xf32>
    %120 = vector.shape_cast %119 : vector<1x8x288xf32> to vector<8x288xf32>
    %c8_155 = arith.constant 8 : index
    %c288_156 = arith.constant 288 : index
    %121 = vector.load %arg9[%c8_155, %c288_156] : memref<72x576xf32, #tpu.memory_space<vmem>>, vector<8x288xf32>
    tpu.vector_store %arg9[%c8_155, %c288_156], %120 {strides = array<i32>} : memref<72x576xf32, #tpu.memory_space<vmem>>, vector<8x288xf32>,
    %c1_157 = arith.constant 1 : index
    %c0_158 = arith.constant 0 : index
    %c2_159 = arith.constant 2 : index
    %122 = vector.load %arg8[%c1_157, %c0_158, %c2_159] : memref<2x8x342xf32, #tpu.memory_space<vmem>>, vector<1x8x288xf32>
    %123 = vector.shape_cast %122 : vector<1x8x288xf32> to vector<8x288xf32>
    %c16_160 = arith.constant 16 : index
    %c288_161 = arith.constant 288 : index
    %124 = vector.load %arg9[%c16_160, %c288_161] : memref<72x576xf32, #tpu.memory_space<vmem>>, vector<8x288xf32>
    tpu.vector_store %arg9[%c16_160, %c288_161], %123 {strides = array<i32>} : memref<72x576xf32, #tpu.memory_space<vmem>>, vector<8x288xf32>,
    %c1_162 = arith.constant 1 : index
    %c0_163 = arith.constant 0 : index
    %c18_164 = arith.constant 18 : index
    %125 = vector.load %arg8[%c1_162, %c0_163, %c18_164] : memref<2x8x342xf32, #tpu.memory_space<vmem>>, vector<1x8x288xf32>
    %126 = vector.shape_cast %125 : vector<1x8x288xf32> to vector<8x288xf32>
    %c24_165 = arith.constant 24 : index
    %c288_166 = arith.constant 288 : index
    %127 = vector.load %arg9[%c24_165, %c288_166] : memref<72x576xf32, #tpu.memory_space<vmem>>, vector<8x288xf32>
    tpu.vector_store %arg9[%c24_165, %c288_166], %126 {strides = array<i32>} : memref<72x576xf32, #tpu.memory_space<vmem>>, vector<8x288xf32>,
    %c1_167 = arith.constant 1 : index
    %c0_168 = arith.constant 0 : index
    %c19_169 = arith.constant 19 : index
    %128 = vector.load %arg8[%c1_167, %c0_168, %c19_169] : memref<2x8x342xf32, #tpu.memory_space<vmem>>, vector<1x8x288xf32>
    %129 = vector.shape_cast %128 : vector<1x8x288xf32> to vector<8x288xf32>
    %c32_170 = arith.constant 32 : index
    %c288_171 = arith.constant 288 : index
    %130 = vector.load %arg9[%c32_170, %c288_171] : memref<72x576xf32, #tpu.memory_space<vmem>>, vector<8x288xf32>
    tpu.vector_store %arg9[%c32_170, %c288_171], %129 {strides = array<i32>} : memref<72x576xf32, #tpu.memory_space<vmem>>, vector<8x288xf32>,
    %c1_172 = arith.constant 1 : index
    %c0_173 = arith.constant 0 : index
    %c20_174 = arith.constant 20 : index
    %131 = vector.load %arg8[%c1_172, %c0_173, %c20_174] : memref<2x8x342xf32, #tpu.memory_space<vmem>>, vector<1x8x288xf32>
    %132 = vector.shape_cast %131 : vector<1x8x288xf32> to vector<8x288xf32>
    %c40_175 = arith.constant 40 : index
    %c288_176 = arith.constant 288 : index
    %133 = vector.load %arg9[%c40_175, %c288_176] : memref<72x576xf32, #tpu.memory_space<vmem>>, vector<8x288xf32>
    tpu.vector_store %arg9[%c40_175, %c288_176], %132 {strides = array<i32>} : memref<72x576xf32, #tpu.memory_space<vmem>>, vector<8x288xf32>,
    %c1_177 = arith.constant 1 : index
    %c0_178 = arith.constant 0 : index
    %c36_179 = arith.constant 36 : index
    %134 = vector.load %arg8[%c1_177, %c0_178, %c36_179] : memref<2x8x342xf32, #tpu.memory_space<vmem>>, vector<1x8x288xf32>
    %135 = vector.shape_cast %134 : vector<1x8x288xf32> to vector<8x288xf32>
    %c48_180 = arith.constant 48 : index
    %c288_181 = arith.constant 288 : index
    %136 = vector.load %arg9[%c48_180, %c288_181] : memref<72x576xf32, #tpu.memory_space<vmem>>, vector<8x288xf32>
    tpu.vector_store %arg9[%c48_180, %c288_181], %135 {strides = array<i32>} : memref<72x576xf32, #tpu.memory_space<vmem>>, vector<8x288xf32>,
    %c1_182 = arith.constant 1 : index
    %c0_183 = arith.constant 0 : index
    %c37_184 = arith.constant 37 : index
    %137 = vector.load %arg8[%c1_182, %c0_183, %c37_184] : memref<2x8x342xf32, #tpu.memory_space<vmem>>, vector<1x8x288xf32>
    %138 = vector.shape_cast %137 : vector<1x8x288xf32> to vector<8x288xf32>
    %c56_185 = arith.constant 56 : index
    %c288_186 = arith.constant 288 : index
    %139 = vector.load %arg9[%c56_185, %c288_186] : memref<72x576xf32, #tpu.memory_space<vmem>>, vector<8x288xf32>
    tpu.vector_store %arg9[%c56_185, %c288_186], %138 {strides = array<i32>} : memref<72x576xf32, #tpu.memory_space<vmem>>, vector<8x288xf32>,
    %c1_187 = arith.constant 1 : index
    %c0_188 = arith.constant 0 : index
    %c38_189 = arith.constant 38 : index
    %140 = vector.load %arg8[%c1_187, %c0_188, %c38_189] : memref<2x8x342xf32, #tpu.memory_space<vmem>>, vector<1x8x288xf32>
    %141 = vector.shape_cast %140 : vector<1x8x288xf32> to vector<8x288xf32>
    %c64_190 = arith.constant 64 : index
    %c288_191 = arith.constant 288 : index
    %142 = vector.load %arg9[%c64_190, %c288_191] : memref<72x576xf32, #tpu.memory_space<vmem>>, vector<8x288xf32>
    tpu.vector_store %arg9[%c64_190, %c288_191], %141 {strides = array<i32>} : memref<72x576xf32, #tpu.memory_space<vmem>>, vector<8x288xf32>,
    %c0_192 = arith.constant 0 : index
    %c0_193 = arith.constant 0 : index
    %143 = vector.load %arg5[%c0_192, %c0_193] : memref<8x72xf32, #tpu.memory_space<vmem>>, vector<8x72xf32>
    %c0_194 = arith.constant 0 : index
    %c0_195 = arith.constant 0 : index
    %144 = vector.load %arg9[%c0_194, %c0_195] : memref<72x576xf32, #tpu.memory_space<vmem>>, vector<72x576xf32>
    %cst_196 = arith.constant dense<0.000000e+00> : vector<8x576xf32>
    %145 = tpu.matmul %143, %144, %cst_196 {dimension_numbers = #tpu.dot_dimension_numbers<[1], [0], [0], [1], [0, 0, 1, 1], [], []>} : vector<8x72xf32>, vector<72x576xf32>, vector<8x576xf32> -> vector<8x576xf32>
    %c0_197 = arith.constant 0 : index
    %c0_198 = arith.constant 0 : index
    %146 = vector.load %arg6[%c0_197, %c0_198] : memref<8x1xf32, #tpu.memory_space<vmem>>, vector<8x1xf32>
    %147 = vector.broadcast %146 : vector<8x1xf32> to vector<8x576xf32>
    %148 = arith.addf %145, %147 : vector<8x576xf32>
    %cst_199 = arith.constant 0.000000e+00 : f32
    %149 = vector.broadcast %cst_199 : f32 to vector<8x576xf32>
    %150 = arith.maximumf %148, %149 : vector<8x576xf32>
    %151 = vector.extract_strided_slice %150 {offsets = [0, 0], sizes = [8, 288], strides = [1, 1]} : vector<8x576xf32> to vector<8x288xf32>
    %c0_200 = arith.constant 0 : index
    %c0_201 = arith.constant 0 : index
    %c0_202 = arith.constant 0 : index
    %152 = vector.load %arg7[%c0_200, %c0_201, %c0_202] : memref<2x8x288xf32, #tpu.memory_space<vmem>>, vector<1x8x288xf32>
    %153 = vector.shape_cast %152 : vector<1x8x288xf32> to vector<8x288xf32>
    %154 = vector.shape_cast %151 : vector<8x288xf32> to vector<1x8x288xf32>
    tpu.vector_store %arg7[%c0_200, %c0_201, %c0_202], %154 {strides = array<i32>} : memref<2x8x288xf32, #tpu.memory_space<vmem>>, vector<1x8x288xf32>,
    %155 = vector.extract_strided_slice %150 {offsets = [0, 288], sizes = [8, 288], strides = [1, 1]} : vector<8x576xf32> to vector<8x288xf32>
    %c1_203 = arith.constant 1 : index
    %c0_204 = arith.constant 0 : index
    %c0_205 = arith.constant 0 : index
    %156 = vector.load %arg7[%c1_203, %c0_204, %c0_205] : memref<2x8x288xf32, #tpu.memory_space<vmem>>, vector<1x8x288xf32>
    %157 = vector.shape_cast %156 : vector<1x8x288xf32> to vector<8x288xf32>
    %158 = vector.shape_cast %155 : vector<8x288xf32> to vector<1x8x288xf32>
    tpu.vector_store %arg7[%c1_203, %c0_204, %c0_205], %158 {strides = array<i32>} : memref<2x8x288xf32, #tpu.memory_space<vmem>>, vector<1x8x288xf32>,
    return
  }
  func.func @transform_0(%arg0: i32) -> (i32, i32, i32) {
    %c0_i32 = arith.constant 0 : i32
    %c0_i32_0 = arith.constant 0 : i32
    %c0_i32_1 = arith.constant 0 : i32
    return %arg0, %c0_i32, %c0_i32_0 : i32, i32, i32
  }
  func.func @transform_1(%arg0: i32) -> (i32, i32) {
    %c0_i32 = arith.constant 0 : i32
    %c0_i32_0 = arith.constant 0 : i32
    %c0_i32_1 = arith.constant 0 : i32
    return %c0_i32, %c0_i32_0 : i32, i32
  }
  func.func @transform_2(%arg0: i32) -> (i32, i32) {
    %c0_i32 = arith.constant 0 : i32
    %c0_i32_0 = arith.constant 0 : i32
    %c0_i32_1 = arith.constant 0 : i32
    return %c0_i32, %c0_i32_0 : i32, i32
  }
  func.func @transform_3(%arg0: i32) -> (i32, i32) {
    %c0_i32 = arith.constant 0 : i32
    %c0_i32_0 = arith.constant 0 : i32
    %c0_i32_1 = arith.constant 0 : i32
    return %c0_i32, %c0_i32_0 : i32, i32
  }
  func.func @transform_4(%arg0: i32) -> (i32, i32) {
    %c0_i32 = arith.constant 0 : i32
    %c0_i32_0 = arith.constant 0 : i32
    %c0_i32_1 = arith.constant 0 : i32
    return %c0_i32, %c0_i32_0 : i32, i32
  }
  func.func @transform_5(%arg0: i32) -> (i32, i32) {
    %c0_i32 = arith.constant 0 : i32
    %c0_i32_0 = arith.constant 0 : i32
    %c0_i32_1 = arith.constant 0 : i32
    return %c0_i32, %c0_i32_0 : i32, i32
  }
  func.func @transform_6(%arg0: i32) -> (i32, i32, i32) {
    %c0_i32 = arith.constant 0 : i32
    %c0_i32_0 = arith.constant 0 : i32
    %c0_i32_1 = arith.constant 0 : i32
    return %arg0, %c0_i32, %c0_i32_0 : i32, i32, i32
  }
}

</mosaic_0001>

<llo_original>
// kernel: tpu_custom_call.1
$region0: #{tpu_custom_call.1}
  #allocation0 [shape = 'u32[]', space=smem, size = 0x4, offset = 0x4, fixed_abs, tag = 'smem constant byte address 0x4 - core index']
  #allocation1 [shape = 'u32[144,128]{1,0:T(1,128)}', space=vmem, size = 0x12000, scoped, tag = 'internal scratch']
  #allocation2 [shape = 'f32[2,8,342]{2,1,0:T(8,128)}', space=vmem, size = 0x6000, scoped, tag = 'scratch operand']
  #allocation3 [shape = 'f32[72,576]{1,0:T(8,128)}', space=vmem, size = 0x2d000, scoped, tag = 'scratch operand']
  %s0 = inlined_call_operand.hbm [shape: f32[4,8,342], index: 0, kind: input, shape index: {}]
  %s1 = inlined_call_operand.vmem [shape: f32[1,576], index: 1, kind: input, shape index: {}]
  %s2 = inlined_call_operand.vmem [shape: f32[8,72], index: 2, kind: input, shape index: {}]
  %s3 = inlined_call_operand.vmem [shape: f32[8,1], index: 3, kind: input, shape index: {}]
  %s4 = inlined_call_operand.vmem [shape: f32[8,72], index: 4, kind: input, shape index: {}]
  %s5 = inlined_call_operand.vmem [shape: f32[8,1], index: 5, kind: input, shape index: {}]
  %s6 = inlined_call_operand.hbm [shape: f32[4,8,288], index: 6, kind: output, shape index: {}]
  %s7 = sld [smem:[#allocation0]]
  $region61: #{tpu_custom_call.1} parent=0
    _
  %s9 = ssub.s32 1, %s7
  %s10 = scalar_select 0, %s9, %s7
  $region1: #{tpu_custom_call.1} parent=0
    #allocation4 [shape = 'u8[49152]{0}', space=vmem, size = 0xc000, scoped, tag = 'input window, operand 0']
    #allocation5 [shape = 's32[2]{0}', space=sflag, size = 0x8, scoped, tag = 'scoped memory for tpu_custom_call.1']
    #allocation6 [shape = 's32[2]{0}', space=sflag, size = 0x8, scoped, tag = 'scoped memory for tpu_custom_call.1']
    #allocation7 [shape = 'u8[49152]{0}', space=vmem, size = 0xc000, scoped, tag = 'output window, operand 0']
    %11 = vsyncpa [#allocation5], 0
    %s12 = scalar_lea.sflag [#allocation5], 1
    %13 = vsyncpa %s12, 0
    %14 = vsyncpa [#allocation6], 0
    %s15 = scalar_lea.sflag [#allocation6], 1
    %16 = vsyncpa %s15, 0
    loop: start=0, step=1, limit=4
    $region2: #{tpu_custom_call.1} parent=1 // loop_pre_header
      _
    $region3: #{tpu_custom_call.1} parent=1 // loop_header
      %s18 = sphi 0, %s22
      %p19 = scmp.ge.s32.totalorder %s18, 4
      %s28 = sphi 0, %s30
      %s31 = sphi 0, %s28
      %s32 = sphi 0, %s31
      %s48 = sphi 0, %s32
      %s52 = sphi 0, %s52
      %s54 = sphi 0, %s52
      %s55 = sphi 0, %s54
      %s69 = sphi 0, %s55
      %s73 = sphi 0, %s73
      %s75 = sphi 0, %s73
      %s76 = sphi 0, %s75
      %s90 = sphi 0, %s76
      %s94 = sphi 0, %s94
      %s96 = sphi 0, %s94
      %s97 = sphi 0, %s96
      %s111 = sphi 0, %s97
      %s115 = sphi 0, %s115
      %s117 = sphi 0, %s115
      %s118 = sphi 0, %s117
      %s132 = sphi 0, %s118
      %s136 = sphi 0, %s136
      %s138 = sphi 0, %s136
      %s139 = sphi 0, %s138
      %s153 = sphi 0, %s139
      %s159 = sphi 0, %s161
      %s162 = sphi 0, %s159
      %s163 = sphi 0, %s162
      %s179 = sphi 0, %s163
    $region4: #{tpu_custom_call.1} parent=1 // loop_header_branch
      %21 = sbr.rel (%p19) target = $region8
    $region5: #{tpu_custom_call.1} parent=1 // loop_body
      %s23 = ssub.s32 %s18, 1
      %s24 = ssub.s32 %s18, 2
      %s25 = sadd.s32 %s18, 1
      %s26 = ssub.s32 %s18, %s25
      %p27 = scmp.eq.s32.totalorder %s26, 0
      %s29 = sadd.s32 %s28, 1
      %s30 = scalar_select %p27, %s28, %s29
      %p33 = pneg %p27
      %p34 = scmp.eq.s32.totalorder %s18, 1
      %p35 = por %p33, %p34
      %p36 = scmp.ne.s32.totalorder %s28, %s31
      %p37 = scmp.eq.s32.totalorder %s18, 0
      %p38 = por %p36, %p37
      %p39 = scmp.ne.s32.totalorder %s28, %s31
      %p40 = scmp.eq.s32.totalorder %s23, 1
      %p41 = por %p39, %p40
      %p42 = scmp.ne.s32.totalorder %s31, %s32
      %p43 = scmp.eq.s32.totalorder %s23, 0
      %p44 = por %p42, %p43
      %p45 = scmp.ne.s32.totalorder %s31, %s32
      %p46 = scmp.eq.s32.totalorder %s24, 1
      %p47 = por %p45, %p46
      %p49 = scmp.ne.s32.totalorder %s32, %s48
      %p50 = scmp.eq.s32.totalorder %s24, 0
      %p51 = por %p49, %p50
      %s53 = sadd.s32 %s52, 1
      %p56 = scmp.eq.s32.totalorder %s18, 1
      %p57 = scmp.ne.s32.totalorder %s52, %s54
      %p58 = scmp.eq.s32.totalorder %s18, 0
      %p59 = por %p57, %p58
      %p60 = scmp.ne.s32.totalorder %s52, %s54
      %p61 = scmp.eq.s32.totalorder %s23, 1
      %p62 = por %p60, %p61
      %p63 = scmp.ne.s32.totalorder %s54, %s55
      %p64 = scmp.eq.s32.totalorder %s23, 0
      %p65 = por %p63, %p64
      %p66 = scmp.ne.s32.totalorder %s54, %s55
      %p67 = scmp.eq.s32.totalorder %s24, 1
      %p68 = por %p66, %p67
      %p70 = scmp.ne.s32.totalorder %s55, %s69
      %p71 = scmp.eq.s32.totalorder %s24, 0
      %p72 = por %p70, %p71
      %s74 = sadd.s32 %s73, 1
      %p77 = scmp.eq.s32.totalorder %s18, 1
      %p78 = scmp.ne.s32.totalorder %s73, %s75
      %p79 = scmp.eq.s32.totalorder %s18, 0
      %p80 = por %p78, %p79
      %p81 = scmp.ne.s32.totalorder %s73, %s75
      %p82 = scmp.eq.s32.totalorder %s23, 1
      %p83 = por %p81, %p82
      %p84 = scmp.ne.s32.totalorder %s75, %s76
      %p85 = scmp.eq.s32.totalorder %s23, 0
      %p86 = por %p84, %p85
      %p87 = scmp.ne.s32.totalorder %s75, %s76
      %p88 = scmp.eq.s32.totalorder %s24, 1
      %p89 = por %p87, %p88
      %p91 = scmp.ne.s32.totalorder %s76, %s90
      %p92 = scmp.eq.s32.totalorder %s24, 0
      %p93 = por %p91, %p92
      %s95 = sadd.s32 %s94, 1
      %p98 = scmp.eq.s32.totalorder %s18, 1
      %p99 = scmp.ne.s32.totalorder %s94, %s96
      %p100 = scmp.eq.s32.totalorder %s18, 0
      %p101 = por %p99, %p100
      %p102 = scmp.ne.s32.totalorder %s94, %s96
      %p103 = scmp.eq.s32.totalorder %s23, 1
      %p104 = por %p102, %p103
      %p105 = scmp.ne.s32.totalorder %s96, %s97
      %p106 = scmp.eq.s32.totalorder %s23, 0
      %p107 = por %p105, %p106
      %p108 = scmp.ne.s32.totalorder %s96, %s97
      %p109 = scmp.eq.s32.totalorder %s24, 1
      %p110 = por %p108, %p109
      %p112 = scmp.ne.s32.totalorder %s97, %s111
      %p113 = scmp.eq.s32.totalorder %s24, 0
      %p114 = por %p112, %p113
      %s116 = sadd.s32 %s115, 1
      %p119 = scmp.eq.s32.totalorder %s18, 1
      %p120 = scmp.ne.s32.totalorder %s115, %s117
      %p121 = scmp.eq.s32.totalorder %s18, 0
      %p122 = por %p120, %p121
      %p123 = scmp.ne.s32.totalorder %s115, %s117
      %p124 = scmp.eq.s32.totalorder %s23, 1
      %p125 = por %p123, %p124
      %p126 = scmp.ne.s32.totalorder %s117, %s118
      %p127 = scmp.eq.s32.totalorder %s23, 0
      %p128 = por %p126, %p127
      %p129 = scmp.ne.s32.totalorder %s117, %s118
      %p130 = scmp.eq.s32.totalorder %s24, 1
      %p131 = por %p129, %p130
      %p133 = scmp.ne.s32.totalorder %s118, %s132
      %p134 = scmp.eq.s32.totalorder %s24, 0
      %p135 = por %p133, %p134
      %s137 = sadd.s32 %s136, 1
      %p140 = scmp.eq.s32.totalorder %s18, 1
      %p141 = scmp.ne.s32.totalorder %s136, %s138
      %p142 = scmp.eq.s32.totalorder %s18, 0
      %p143 = por %p141, %p142
      %p144 = scmp.ne.s32.totalorder %s136, %s138
      %p145 = scmp.eq.s32.totalorder %s23, 1
      %p146 = por %p144, %p145
      %p147 = scmp.ne.s32.totalorder %s138, %s139
      %p148 = scmp.eq.s32.totalorder %s23, 0
      %p149 = por %p147, %p148
      %p150 = scmp.ne.s32.totalorder %s138, %s139
      %p151 = scmp.eq.s32.totalorder %s24, 1
      %p152 = por %p150, %p151
      %p154 = scmp.ne.s32.totalorder %s139, %s153
      %p155 = scmp.eq.s32.totalorder %s24, 0
      %p156 = por %p154, %p155
      %s157 = ssub.s32 %s18, %s25
      %p158 = scmp.eq.s32.totalorder %s157, 0
      %s160 = sadd.s32 %s159, 1
      %s161 = scalar_select %p158, %s159, %s160
      %p164 = pneg %p158
      %p165 = scmp.eq.s32.totalorder %s18, 1
      %p166 = por %p164, %p165
      %p167 = scmp.ne.s32.totalorder %s159, %s162
      %p168 = scmp.eq.s32.totalorder %s18, 0
      %p169 = por %p167, %p168
      %p170 = scmp.ne.s32.totalorder %s159, %s162
      %p171 = scmp.eq.s32.totalorder %s23, 1
      %p172 = por %p170, %p171
      %p173 = scmp.ne.s32.totalorder %s162, %s163
      %p174 = scmp.eq.s32.totalorder %s23, 0
      %p175 = por %p173, %p174
      %p176 = scmp.ne.s32.totalorder %s162, %s163
      %p177 = scmp.eq.s32.totalorder %s24, 1
      %p178 = por %p176, %p177
      %p180 = scmp.ne.s32.totalorder %s163, %s179
      %p181 = scmp.eq.s32.totalorder %s24, 0
      %p182 = por %p180, %p181
      %p183 = scmp.le.s32.totalorder 1, %s18
      %p184 = scmp.lt.s32.totalorder %s18, 3
      %p185 = pnand %p183, %p184
      %p186 = pneg %p185
      // Predicated region
      $region9: #{tpu_custom_call.1} parent=5 // pred_check
        _
      $region10: #{tpu_custom_call.1} parent=5 // pred_check_branch
        %188 = sbr.rel (%p185) target = $region12
      $region11: #{tpu_custom_call.1} parent=5 // pred_region
        %s189 = ssub.s32 %s18, 1
        // Predicated region
        $region13: #{tpu_custom_call.1} parent=11 // pred_check
          %p190 = pneg %p65
        $region14: #{tpu_custom_call.1} parent=11 // pred_check_branch
          %192 = sbr.rel (%p190) target = $region16
        $region15: #{tpu_custom_call.1} parent=11 // pred_region
          _
        $region16: #{tpu_custom_call.1} parent=11 // pred_fallthru
          _
        // Predicated region
        $region17: #{tpu_custom_call.1} parent=11 // pred_check
          %p193 = pneg %p86
        $region18: #{tpu_custom_call.1} parent=11 // pred_check_branch
          %195 = sbr.rel (%p193) target = $region20
        $region19: #{tpu_custom_call.1} parent=11 // pred_region
          _
        $region20: #{tpu_custom_call.1} parent=11 // pred_fallthru
          _
        // Predicated region
        $region21: #{tpu_custom_call.1} parent=11 // pred_check
          %p196 = pneg %p107
        $region22: #{tpu_custom_call.1} parent=11 // pred_check_branch
          %198 = sbr.rel (%p196) target = $region24
        $region23: #{tpu_custom_call.1} parent=11 // pred_region
          _
        $region24: #{tpu_custom_call.1} parent=11 // pred_fallthru
          _
        // Predicated region
        $region25: #{tpu_custom_call.1} parent=11 // pred_check
          %p199 = pneg %p128
        $region26: #{tpu_custom_call.1} parent=11 // pred_check_branch
          %201 = sbr.rel (%p199) target = $region28
        $region27: #{tpu_custom_call.1} parent=11 // pred_region
          _
        $region28: #{tpu_custom_call.1} parent=11 // pred_fallthru
          _
        // Predicated region
        $region29: #{tpu_custom_call.1} parent=11 // pred_check
          %p202 = pneg %p149
        $region30: #{tpu_custom_call.1} parent=11 // pred_check_branch
          %204 = sbr.rel (%p202) target = $region32
        $region31: #{tpu_custom_call.1} parent=11 // pred_region
          _
        $region32: #{tpu_custom_call.1} parent=11 // pred_fallthru
          _
      $region12: #{tpu_custom_call.1} parent=5 // pred_fallthru
        _
      %p205 = scmp.lt.s32.totalorder %s18, 2
      // Predicated region
      $region33: #{tpu_custom_call.1} parent=5 // pred_check
        %p206 = pneg %p205
      $region34: #{tpu_custom_call.1} parent=5 // pred_check_branch
        %208 = sbr.rel (%p206) target = $region36
      $region35: #{tpu_custom_call.1} parent=5 // pred_region
        // Predicated region
        $region37: #{tpu_custom_call.1} parent=35 // pred_check
          %p209 = pneg %p38
        $region38: #{tpu_custom_call.1} parent=35 // pred_check_branch
          %211 = sbr.rel (%p209) target = $region40
        $region39: #{tpu_custom_call.1} parent=35 // pred_region
          %s212 = sand.u32 %s28, 1
          %s213 = scalar_lea.sflag [#allocation5], %s212
          %s214 = sand.u32 %s28, 1
          %s215 = smul.addr %s214, 48
          %s216 = scalar_lea.vmem [#allocation4], %s215
          %s217 = smul.u32 2, %s18
          %s219 = ssub.s32 768, 768
          %220 = vsyncadd %s213, %s219
          %s221 = smul.addr %s217, 3
          %s222 = smul.addr %s221, 128
          %s223 = scalar_lea.hbm %s0, %s222
          %s224 = sshll.u32 %s216, 4
          %s225 = int_to_ptr.vmem [resolvable:$true] %s224
          %230 = dma.hbm_to_vmem [thread:$0]  %s223, 768, %s225, %s213, 384, 384, 24
        $region40: #{tpu_custom_call.1} parent=35 // pred_fallthru
          _
      $region36: #{tpu_custom_call.1} parent=5 // pred_fallthru
        _
      %p231 = scmp.le.s32.totalorder 1, %s18
      %p232 = scmp.lt.s32.totalorder %s18, 3
      %p233 = pnand %p231, %p232
      %p234 = pneg %p233
      // Predicated region
      $region41: #{tpu_custom_call.1} parent=5 // pred_check
        _
      $region42: #{tpu_custom_call.1} parent=5 // pred_check_branch
        %236 = sbr.rel (%p233) target = $region44
      $region43: #{tpu_custom_call.1} parent=5 // pred_region
        %s237 = ssub.s32 %s18, 1
        %s238 = sand.u32 %s31, 1
        %s239 = scalar_lea.sflag [#allocation5], %s238
        %s240 = sand.u32 %s31, 1
        %s241 = smul.addr %s240, 48
        %s242 = scalar_lea.vmem [#allocation4], %s241
        // Predicated region
        $region45: #{tpu_custom_call.1} parent=43 // pred_check
          %p243 = pneg %p44
        $region46: #{tpu_custom_call.1} parent=43 // pred_check_branch
          %245 = sbr.rel (%p243) target = $region48
        $region47: #{tpu_custom_call.1} parent=43 // pred_region
          %246 = dma.done %s239, 768
        $region48: #{tpu_custom_call.1} parent=43 // pred_fallthru
          _
        %s247 = sand.u32 %s31, 1
        %s248 = scalar_lea.sflag [#allocation5], %s247
        %s249 = sand.u32 %s31, 1
        %s250 = smul.addr %s249, 48
        %s251 = scalar_lea.vmem [#allocation4], %s250
        %p252 = pneg %p44
        %p253 = pneg %p41
        %p254 = pneg %p65
        %p255 = pneg %p62
        %p256 = pneg %p86
        %p257 = pneg %p83
        %p258 = pneg %p107
        %p259 = pneg %p104
        %p260 = pneg %p128
        %p261 = pneg %p125
        %p262 = pneg %p149
        %p263 = pneg %p146
        %p264 = pneg %p175
        %p265 = pneg %p172
        %s266 = sand.u32 %s162, 1
        %s267 = scalar_lea.sflag [#allocation6], %s266
        %s268 = sand.u32 %s162, 1
        %s269 = smul.addr %s268, 48
        %s270 = scalar_lea.vmem [#allocation7], %s269
        %s271 = smul.u32 2, %s23
        %s272 = smul.u32 2, %s23
        %v273 = vld [vmem:[%s242] sm:$0xff]
        %v274 = vld [vmem:[%s242 + $0x8] sm:$0xff]
        %v275 = vld [vmem:[%s242 + $0x10] sm:$0xff]
        %276 = vst [vmem:[#allocation3] sm:$0xff] %v273
        %277 = vst [vmem:[#allocation3 + $0x8] sm:$0xff] %v274
        %vm278 = vcmask 261120
        %279 = vst.msk [vmem:[#allocation3 + $0x10] sm:$0xff] %vm278, %v275
        %v280 = vld [vmem:[%s242] sm:$0xff]
        %v281 = vld [vmem:[%s242 + $0x8] sm:$0xff]
        %v282 = vld [vmem:[%s242 + $0x10] sm:$0xff]
        %286 = vrot.lane.b32.xlu0 %v280, 127
        %v287 = vpop.permute.xlu0 %286
        %288 = vrot.lane.b32.xlu0 %v281, 127
        %v289 = vpop.permute.xlu0 %288
        %290 = vrot.lane.b32.xlu0 %v282, 127
        %v291 = vpop.permute.xlu0 %290
        %vm292 = vcmask 1039360
        %v293 = vsel %vm292, %v287, %v289
        %v294 = vsel %vm292, %v289, %v291
        %298 = vst [vmem:[#allocation3 + $0x28] sm:$0xff] %v293
        %299 = vst [vmem:[#allocation3 + $0x30] sm:$0xff] %v294
        %300 = vst.msk [vmem:[#allocation3 + $0x38] sm:$0xff] %vm278, %v291
        %v301 = vld [vmem:[%s242] sm:$0xff]
        %v302 = vld [vmem:[%s242 + $0x8] sm:$0xff]
        %v303 = vld [vmem:[%s242 + $0x10] sm:$0xff]
        %307 = vrot.lane.b32.xlu0 %v301, 126
        %v308 = vpop.permute.xlu0 %307
        %309 = vrot.lane.b32.xlu0 %v302, 126
        %v310 = vpop.permute.xlu0 %309
        %311 = vrot.lane.b32.xlu0 %v303, 126
        %v312 = vpop.permute.xlu0 %311
        %vm313 = vcmask 1031168
        %v314 = vsel %vm313, %v308, %v310
        %v315 = vsel %vm313, %v310, %v312
        %319 = vst [vmem:[#allocation3 + $0x50] sm:$0xff] %v314
        %320 = vst [vmem:[#allocation3 + $0x58] sm:$0xff] %v315
        %321 = vst.msk [vmem:[#allocation3 + $0x60] sm:$0xff] %vm278, %v312
        %v322 = vld [vmem:[%s242] sm:$0xff]
        %v323 = vld [vmem:[%s242 + $0x8] sm:$0xff]
        %v324 = vld [vmem:[%s242 + $0x10] sm:$0xff]
        %328 = vrot.lane.b32.xlu0 %v322, 110
        %v329 = vpop.permute.xlu0 %328
        %330 = vrot.lane.b32.xlu0 %v323, 110
        %v331 = vpop.permute.xlu0 %330
        %332 = vrot.lane.b32.xlu0 %v324, 110
        %v333 = vpop.permute.xlu0 %332
        %vm334 = vcmask 900096
        %v335 = vsel %vm334, %v329, %v331
        %v336 = vsel %vm334, %v331, %v333
        %340 = vst [vmem:[#allocation3 + $0x78] sm:$0xff] %v335
        %341 = vst [vmem:[#allocation3 + $0x80] sm:$0xff] %v336
        %342 = vst.msk [vmem:[#allocation3 + $0x88] sm:$0xff] %vm278, %v333
        %v343 = vld [vmem:[%s242] sm:$0xff]
        %v344 = vld [vmem:[%s242 + $0x8] sm:$0xff]
        %v345 = vld [vmem:[%s242 + $0x10] sm:$0xff]
        %349 = vrot.lane.b32.xlu0 %v343, 109
        %v350 = vpop.permute.xlu0 %349
        %351 = vrot.lane.b32.xlu0 %v344, 109
        %v352 = vpop.permute.xlu0 %351
        %353 = vrot.lane.b32.xlu0 %v345, 109
        %v354 = vpop.permute.xlu0 %353
        %vm355 = vcmask 891904
        %v356 = vsel %vm355, %v350, %v352
        %v357 = vsel %vm355, %v352, %v354
        %361 = vst [vmem:[#allocation3 + $0xa0] sm:$0xff] %v356
        %362 = vst [vmem:[#allocation3 + $0xa8] sm:$0xff] %v357
        %363 = vst.msk [vmem:[#allocation3 + $0xb0] sm:$0xff] %vm278, %v354
        %v364 = vld [vmem:[%s242] sm:$0xff]
        %v365 = vld [vmem:[%s242 + $0x8] sm:$0xff]
        %v366 = vld [vmem:[%s242 + $0x10] sm:$0xff]
        %370 = vrot.lane.b32.xlu0 %v364, 108
        %v371 = vpop.permute.xlu0 %370
        %372 = vrot.lane.b32.xlu0 %v365, 108
        %v373 = vpop.permute.xlu0 %372
        %374 = vrot.lane.b32.xlu0 %v366, 108
        %v375 = vpop.permute.xlu0 %374
        %vm376 = vcmask 883712
        %v377 = vsel %vm376, %v371, %v373
        %v378 = vsel %vm376, %v373, %v375
        %382 = vst [vmem:[#allocation3 + $0xc8] sm:$0xff] %v377
        %383 = vst [vmem:[#allocation3 + $0xd0] sm:$0xff] %v378
        %384 = vst.msk [vmem:[#allocation3 + $0xd8] sm:$0xff] %vm278, %v375
        %v385 = vld [vmem:[%s242] sm:$0xff]
        %v386 = vld [vmem:[%s242 + $0x8] sm:$0xff]
        %v387 = vld [vmem:[%s242 + $0x10] sm:$0xff]
        %391 = vrot.lane.b32.xlu0 %v385, 92
        %v392 = vpop.permute.xlu0 %391
        %393 = vrot.lane.b32.xlu0 %v386, 92
        %v394 = vpop.permute.xlu0 %393
        %395 = vrot.lane.b32.xlu0 %v387, 92
        %v396 = vpop.permute.xlu0 %395
        %vm397 = vcmask 752640
        %v398 = vsel %vm397, %v392, %v394
        %v399 = vsel %vm397, %v394, %v396
        %403 = vst [vmem:[#allocation3 + $0xf0] sm:$0xff] %v398
        %404 = vst [vmem:[#allocation3 + $0xf8] sm:$0xff] %v399
        %405 = vst.msk [vmem:[#allocation3 + $0x100] sm:$0xff] %vm278, %v396
        %v406 = vld [vmem:[%s242] sm:$0xff]
        %v407 = vld [vmem:[%s242 + $0x8] sm:$0xff]
        %v408 = vld [vmem:[%s242 + $0x10] sm:$0xff]
        %412 = vrot.lane.b32.xlu0 %v406, 91
        %v413 = vpop.permute.xlu0 %412
        %414 = vrot.lane.b32.xlu0 %v407, 91
        %v415 = vpop.permute.xlu0 %414
        %416 = vrot.lane.b32.xlu0 %v408, 91
        %v417 = vpop.permute.xlu0 %416
        %vm418 = vcmask 744448
        %v419 = vsel %vm418, %v413, %v415
        %v420 = vsel %vm418, %v415, %v417
        %424 = vst [vmem:[#allocation3 + $0x118] sm:$0xff] %v419
        %425 = vst [vmem:[#allocation3 + $0x120] sm:$0xff] %v420
        %426 = vst.msk [vmem:[#allocation3 + $0x128] sm:$0xff] %vm278, %v417
        %v427 = vld [vmem:[%s242] sm:$0xff]
        %v428 = vld [vmem:[%s242 + $0x8] sm:$0xff]
        %v429 = vld [vmem:[%s242 + $0x10] sm:$0xff]
        %433 = vrot.lane.b32.xlu0 %v427, 90
        %v434 = vpop.permute.xlu0 %433
        %435 = vrot.lane.b32.xlu0 %v428, 90
        %v436 = vpop.permute.xlu0 %435
        %437 = vrot.lane.b32.xlu0 %v429, 90
        %v438 = vpop.permute.xlu0 %437
        %vm439 = vcmask 736256
        %v440 = vsel %vm439, %v434, %v436
        %v441 = vsel %vm439, %v436, %v438
        %445 = vst [vmem:[#allocation3 + $0x140] sm:$0xff] %v440
        %446 = vst [vmem:[#allocation3 + $0x148] sm:$0xff] %v441
        %447 = vst.msk [vmem:[#allocation3 + $0x150] sm:$0xff] %vm278, %v438
        %s448 = scalar_lea.vmem %s242, 24 [#allocation4]
        %v449 = vld [vmem:[%s448] sm:$0xff]
        %v450 = vld [vmem:[%s448 + $0x8] sm:$0xff]
        %v451 = vld [vmem:[%s448 + $0x10] sm:$0xff]
        %455 = vrot.lane.b32.xlu0 %v449, 32
        %v456 = vpop.permute.xlu0 %455
        %457 = vrot.lane.b32.xlu0 %v450, 32
        %v458 = vpop.permute.xlu0 %457
        %459 = vrot.lane.b32.xlu0 %v451, 32
        %v460 = vpop.permute.xlu0 %459
        %v461 = vsel %vm278, %v456, %v458
        %v462 = vsel %vm278, %v458, %v460
        %vm466 = vcmask 1047808
        %467 = vst.msk [vmem:[#allocation3 + $0x10] sm:$0xff] %vm466, %v456
        %468 = vst [vmem:[#allocation3 + $0x18] sm:$0xff] %v461
        %vm469 = vcmask 523264
        %470 = vst.msk [vmem:[#allocation3 + $0x20] sm:$0xff] %vm469, %v462
        %v471 = vld [vmem:[%s448] sm:$0xff]
        %v472 = vld [vmem:[%s448 + $0x8] sm:$0xff]
        %v473 = vld [vmem:[%s448 + $0x10] sm:$0xff]
        %477 = vrot.lane.b32.xlu0 %v471, 31
        %v478 = vpop.permute.xlu0 %477
        %479 = vrot.lane.b32.xlu0 %v472, 31
        %v480 = vpop.permute.xlu0 %479
        %481 = vrot.lane.b32.xlu0 %v473, 31
        %v482 = vpop.permute.xlu0 %481
        %vm483 = vcmask 252928
        %v484 = vsel %vm483, %v478, %v480
        %v485 = vsel %vm483, %v480, %v482
        %489 = vst.msk [vmem:[#allocation3 + $0x38] sm:$0xff] %vm466, %v478
        %490 = vst [vmem:[#allocation3 + $0x40] sm:$0xff] %v484
        %491 = vst.msk [vmem:[#allocation3 + $0x48] sm:$0xff] %vm469, %v485
        %v492 = vld [vmem:[%s448] sm:$0xff]
        %v493 = vld [vmem:[%s448 + $0x8] sm:$0xff]
        %v494 = vld [vmem:[%s448 + $0x10] sm:$0xff]
        %498 = vrot.lane.b32.xlu0 %v492, 30
        %v499 = vpop.permute.xlu0 %498
        %500 = vrot.lane.b32.xlu0 %v493, 30
        %v501 = vpop.permute.xlu0 %500
        %502 = vrot.lane.b32.xlu0 %v494, 30
        %v503 = vpop.permute.xlu0 %502
        %vm504 = vcmask 244736
        %v505 = vsel %vm504, %v499, %v501
        %v506 = vsel %vm504, %v501, %v503
        %510 = vst.msk [vmem:[#allocation3 + $0x60] sm:$0xff] %vm466, %v499
        %511 = vst [vmem:[#allocation3 + $0x68] sm:$0xff] %v505
        %512 = vst.msk [vmem:[#allocation3 + $0x70] sm:$0xff] %vm469, %v506
        %v513 = vld [vmem:[%s448] sm:$0xff]
        %v514 = vld [vmem:[%s448 + $0x8] sm:$0xff]
        %v515 = vld [vmem:[%s448 + $0x10] sm:$0xff]
        %519 = vrot.lane.b32.xlu0 %v513, 14
        %v520 = vpop.permute.xlu0 %519
        %521 = vrot.lane.b32.xlu0 %v514, 14
        %v522 = vpop.permute.xlu0 %521
        %523 = vrot.lane.b32.xlu0 %v515, 14
        %v524 = vpop.permute.xlu0 %523
        %vm525 = vcmask 113664
        %v526 = vsel %vm525, %v520, %v522
        %v527 = vsel %vm525, %v522, %v524
        %531 = vst.msk [vmem:[#allocation3 + $0x88] sm:$0xff] %vm466, %v520
        %532 = vst [vmem:[#allocation3 + $0x90] sm:$0xff] %v526
        %533 = vst.msk [vmem:[#allocation3 + $0x98] sm:$0xff] %vm469, %v527
        %v534 = vld [vmem:[%s448] sm:$0xff]
        %v535 = vld [vmem:[%s448 + $0x8] sm:$0xff]
        %v536 = vld [vmem:[%s448 + $0x10] sm:$0xff]
        %540 = vrot.lane.b32.xlu0 %v534, 13
        %v541 = vpop.permute.xlu0 %540
        %542 = vrot.lane.b32.xlu0 %v535, 13
        %v543 = vpop.permute.xlu0 %542
        %544 = vrot.lane.b32.xlu0 %v536, 13
        %v545 = vpop.permute.xlu0 %544
        %vm546 = vcmask 105472
        %v547 = vsel %vm546, %v541, %v543
        %v548 = vsel %vm546, %v543, %v545
        %552 = vst.msk [vmem:[#allocation3 + $0xb0] sm:$0xff] %vm466, %v541
        %553 = vst [vmem:[#allocation3 + $0xb8] sm:$0xff] %v547
        %554 = vst.msk [vmem:[#allocation3 + $0xc0] sm:$0xff] %vm469, %v548
        %v555 = vld [vmem:[%s448] sm:$0xff]
        %v556 = vld [vmem:[%s448 + $0x8] sm:$0xff]
        %v557 = vld [vmem:[%s448 + $0x10] sm:$0xff]
        %561 = vrot.lane.b32.xlu0 %v555, 12
        %v562 = vpop.permute.xlu0 %561
        %563 = vrot.lane.b32.xlu0 %v556, 12
        %v564 = vpop.permute.xlu0 %563
        %565 = vrot.lane.b32.xlu0 %v557, 12
        %v566 = vpop.permute.xlu0 %565
        %vm567 = vcmask 97280
        %v568 = vsel %vm567, %v562, %v564
        %v569 = vsel %vm567, %v564, %v566
        %573 = vst.msk [vmem:[#allocation3 + $0xd8] sm:$0xff] %vm466, %v562
        %574 = vst [vmem:[#allocation3 + $0xe0] sm:$0xff] %v568
        %575 = vst.msk [vmem:[#allocation3 + $0xe8] sm:$0xff] %vm469, %v569
        %v576 = vld [vmem:[%s448] sm:$0xff]
        %v577 = vld [vmem:[%s448 + $0x8] sm:$0xff]
        %v578 = vld [vmem:[%s448 + $0x10] sm:$0xff]
        %582 = vrot.lane.b32.xlu0 %v576, 124
        %v583 = vpop.permute.xlu0 %582
        %584 = vrot.lane.b32.xlu0 %v577, 124
        %v585 = vpop.permute.xlu0 %584
        %586 = vrot.lane.b32.xlu0 %v578, 124
        %v587 = vpop.permute.xlu0 %586
        %vm588 = vcmask 1014784
        %v589 = vsel %vm588, %v583, %v585
        %v590 = vsel %vm588, %v585, %v587
        %594 = vst.msk [vmem:[#allocation3 + $0x100] sm:$0xff] %vm466, %v589
        %595 = vst [vmem:[#allocation3 + $0x108] sm:$0xff] %v590
        %596 = vst.msk [vmem:[#allocation3 + $0x110] sm:$0xff] %vm469, %v587
        %v597 = vld [vmem:[%s448] sm:$0xff]
        %v598 = vld [vmem:[%s448 + $0x8] sm:$0xff]
        %v599 = vld [vmem:[%s448 + $0x10] sm:$0xff]
        %603 = vrot.lane.b32.xlu0 %v597, 123
        %v604 = vpop.permute.xlu0 %603
        %605 = vrot.lane.b32.xlu0 %v598, 123
        %v606 = vpop.permute.xlu0 %605
        %607 = vrot.lane.b32.xlu0 %v599, 123
        %v608 = vpop.permute.xlu0 %607
        %vm609 = vcmask 1006592
        %v610 = vsel %vm609, %v604, %v606
        %v611 = vsel %vm609, %v606, %v608
        %615 = vst.msk [vmem:[#allocation3 + $0x128] sm:$0xff] %vm466, %v610
        %616 = vst [vmem:[#allocation3 + $0x130] sm:$0xff] %v611
        %617 = vst.msk [vmem:[#allocation3 + $0x138] sm:$0xff] %vm469, %v608
        %v618 = vld [vmem:[%s448] sm:$0xff]
        %v619 = vld [vmem:[%s448 + $0x8] sm:$0xff]
        %v620 = vld [vmem:[%s448 + $0x10] sm:$0xff]
        %624 = vrot.lane.b32.xlu0 %v618, 122
        %v625 = vpop.permute.xlu0 %624
        %626 = vrot.lane.b32.xlu0 %v619, 122
        %v627 = vpop.permute.xlu0 %626
        %628 = vrot.lane.b32.xlu0 %v620, 122
        %v629 = vpop.permute.xlu0 %628
        %vm630 = vcmask 998400
        %v631 = vsel %vm630, %v625, %v627
        %v632 = vsel %vm630, %v627, %v629
        %636 = vst.msk [vmem:[#allocation3 + $0x150] sm:$0xff] %vm466, %v631
        %637 = vst [vmem:[#allocation3 + $0x158] sm:$0xff] %v632
        %638 = vst.msk [vmem:[#allocation3 + $0x160] sm:$0xff] %vm469, %v629
        %v639 = vld [vmem:[%s2] sm:$0xff]
        %v640 = vld [vmem:[#allocation3] sm:$0xff]
        %v641 = vld [vmem:[#allocation3 + $0x8] sm:$0xff]
        %v642 = vld [vmem:[#allocation3 + $0x10] sm:$0xff]
        %v643 = vld [vmem:[#allocation3 + $0x18] sm:$0xff]
        %v644 = vld [vmem:[#allocation3 + $0x20] sm:$0xff]
        %v645 = vld [vmem:[#allocation3 + $0x28] sm:$0xff]
        %v646 = vld [vmem:[#allocation3 + $0x30] sm:$0xff]
        %v647 = vld [vmem:[#allocation3 + $0x38] sm:$0xff]
        %v648 = vld [vmem:[#allocation3 + $0x40] sm:$0xff]
        %v649 = vld [vmem:[#allocation3 + $0x48] sm:$0xff]
        %v650 = vld [vmem:[#allocation3 + $0x50] sm:$0xff]
        %v651 = vld [vmem:[#allocation3 + $0x58] sm:$0xff]
        %v652 = vld [vmem:[#allocation3 + $0x60] sm:$0xff]
        %v653 = vld [vmem:[#allocation3 + $0x68] sm:$0xff]
        %v654 = vld [vmem:[#allocation3 + $0x70] sm:$0xff]
        %v655 = vld [vmem:[#allocation3 + $0x78] sm:$0xff]
        %v656 = vld [vmem:[#allocation3 + $0x80] sm:$0xff]
        %v657 = vld [vmem:[#allocation3 + $0x88] sm:$0xff]
        %v658 = vld [vmem:[#allocation3 + $0x90] sm:$0xff]
        %v659 = vld [vmem:[#allocation3 + $0x98] sm:$0xff]
        %v660 = vld [vmem:[#allocation3 + $0xa0] sm:$0xff]
        %v661 = vld [vmem:[#allocation3 + $0xa8] sm:$0xff]
        %v662 = vld [vmem:[#allocation3 + $0xb0] sm:$0xff]
        %v663 = vld [vmem:[#allocation3 + $0xb8] sm:$0xff]
        %v664 = vld [vmem:[#allocation3 + $0xc0] sm:$0xff]
        %v665 = vld [vmem:[#allocation3 + $0xc8] sm:$0xff]
        %v666 = vld [vmem:[#allocation3 + $0xd0] sm:$0xff]
        %v667 = vld [vmem:[#allocation3 + $0xd8] sm:$0xff]
        %v668 = vld [vmem:[#allocation3 + $0xe0] sm:$0xff]
        %v669 = vld [vmem:[#allocation3 + $0xe8] sm:$0xff]
        %v670 = vld [vmem:[#allocation3 + $0xf0] sm:$0xff]
        %v671 = vld [vmem:[#allocation3 + $0xf8] sm:$0xff]
        %v672 = vld [vmem:[#allocation3 + $0x100] sm:$0xff]
        %v673 = vld [vmem:[#allocation3 + $0x108] sm:$0xff]
        %v674 = vld [vmem:[#allocation3 + $0x110] sm:$0xff]
        %v675 = vld [vmem:[#allocation3 + $0x118] sm:$0xff]
        %v676 = vld [vmem:[#allocation3 + $0x120] sm:$0xff]
        %v677 = vld [vmem:[#allocation3 + $0x128] sm:$0xff]
        %v678 = vld [vmem:[#allocation3 + $0x130] sm:$0xff]
        %v679 = vld [vmem:[#allocation3 + $0x138] sm:$0xff]
        %v680 = vld [vmem:[#allocation3 + $0x140] sm:$0xff]
        %v681 = vld [vmem:[#allocation3 + $0x148] sm:$0xff]
        %v682 = vld [vmem:[#allocation3 + $0x150] sm:$0xff]
        %v683 = vld [vmem:[#allocation3 + $0x158] sm:$0xff]
        %v684 = vld [vmem:[#allocation3 + $0x160] sm:$0xff]
        %v685 = vld [vmem:[%s3] sm:$0xff]
        %687 = vset.pattern.permute.xlu0 0
        %688 = vperm.xlu0 %687, %v685
        %v689 = vpop.permute.xlu0 %688
        %vm691 = vcmask 588800
        %v693 = vsel %vm691, %v639, 0
        %695 = vmatprep.subr.mxu0 %v641
        %696 = vmatpush1.msra.mxu0 %v640
        %697 = vmatprep.subr.mxu0 %v646
        %698 = vmatpush1.msra.mxu0 %v645
        %699 = vmatprep.subr.mxu0 %v651
        %700 = vmatpush1.msra.mxu0 %v650
        %701 = vmatprep.subr.mxu0 %v656
        %702 = vmatpush1.msra.mxu0 %v655
        %703 = vmatprep.subr.mxu0 %v661
        %704 = vmatpush1.msra.mxu0 %v660
        %705 = vmatprep.subr.mxu0 %v666
        %706 = vmatpush1.msra.mxu0 %v665
        %707 = vmatprep.subr.mxu0 %v671
        %708 = vmatpush1.msra.mxu0 %v670
        %709 = vmatprep.subr.mxu0 %v676
        %710 = vmatpush1.msra.mxu0 %v675
        %711 = vmatprep.subr.mxu0 %v681
        %712 = vmatpush1.msra.mxu0 %v680
        %713 = vmatprep.subr.mxu0 0.0
        %714 = vmatpush1.msra.mxu0 0.0
        %715 = vmatprep.subr.mxu0 0.0
        %716 = vmatpush1.msra.mxu0 0.0
        %717 = vmatprep.subr.mxu0 0.0
        %718 = vmatpush1.msra.mxu0 0.0
        %719 = vmatprep.subr.mxu0 0.0
        %720 = vmatpush1.msra.mxu0 0.0
        %721 = vmatprep.subr.mxu0 0.0
        %722 = vmatpush1.msra.mxu0 0.0
        %723 = vmatprep.subr.mxu0 0.0
        %724 = vmatpush1.msra.mxu0 0.0
        %725 = vmatprep.subr.mxu0 0.0
        %726 = vmatpush1.msra.mxu0 0.0
        %727 = vmatprep.subr.mxu0 0.0
        %728 = vmatpush1.msra.mxu0 0.0
        %729 = vmatprep.subr.mxu0 0.0
        %730 = vmatpush1.msra.mxu0 0.0
        %731 = vmatprep.subr.mxu0 0.0
        %732 = vmatpush1.msra.mxu0 0.0
        %733 = vmatprep.subr.mxu0 0.0
        %734 = vmatpush1.msra.mxu0 0.0
        %735 = vmatprep.subr.mxu0 0.0
        %736 = vmatpush1.msra.mxu0 0.0
        %737 = vmatprep.subr.mxu0 0.0
        %738 = vmatpush1.msra.mxu0 0.0
        %739 = vmatprep.subr.mxu0 0.0
        %740 = vmatpush1.msra.mxu0 0.0
        %741 = vmatprep.subr.mxu0 0.0
        %742 = vmatpush1.msra.mxu0 0.0
        %743 = vmatprep.subr.mxu0 0.0
        %744 = vmatpush1.msra.mxu0 0.0
        %745 = vmatprep.subr.mxu0 0.0
        %746 = vmatpush1.msra.mxu0 0.0
        %747 = vmatprep.subr.mxu0 0.0
        %748 = vmatpush1.msra.mxu0 0.0
        %749 = vmatprep.subr.mxu0 0.0
        %750 = vmatpush1.msra.mxu0 0.0
        %751 = vmatprep.subr.mxu0 0.0
        %752 = vmatpush1.msra.mxu0 0.0
        %753 = vmatprep.subr.mxu0 0.0
        %754 = vmatpush1.msra.mxu0 0.0
        %755 = vmatprep.subr.mxu0 0.0
        %756 = vmatpush1.msra.mxu0 0.0
        %757 = vmatprep.subr.mxu0 0.0
        %758 = vmatpush1.msra.mxu0 0.0
        %759 = vmatprep.mubr.f32.mxu0 0.0
        %760 = vmatmul.mubr.f32.gmra.mrb[0].mxu0 %v693
        %v761 = vpop.f32.mrb[0].mxu0
        %v762 = vadd.f32 %v689, %v761
        %v763 = vpop.f32.mrb[0].mxu0
        %v764 = vadd.f32 %v689, %v763
        %765 = vdwg.mxu0
        %766 = vmatprep.subr.mxu0 %v643
        %767 = vmatpush1.msra.mxu0 %v642
        %768 = vmatprep.subr.mxu0 %v648
        %769 = vmatpush1.msra.mxu0 %v647
        %770 = vmatprep.subr.mxu0 %v653
        %771 = vmatpush1.msra.mxu0 %v652
        %772 = vmatprep.subr.mxu0 %v658
        %773 = vmatpush1.msra.mxu0 %v657
        %774 = vmatprep.subr.mxu0 %v663
        %775 = vmatpush1.msra.mxu0 %v662
        %776 = vmatprep.subr.mxu0 %v668
        %777 = vmatpush1.msra.mxu0 %v667
        %778 = vmatprep.subr.mxu0 %v673
        %779 = vmatpush1.msra.mxu0 %v672
        %780 = vmatprep.subr.mxu0 %v678
        %781 = vmatpush1.msra.mxu0 %v677
        %782 = vmatprep.subr.mxu0 %v683
        %783 = vmatpush1.msra.mxu0 %v682
        %784 = vmatprep.subr.mxu0 0.0
        %785 = vmatpush1.msra.mxu0 0.0
        %786 = vmatprep.subr.mxu0 0.0
        %787 = vmatpush1.msra.mxu0 0.0
        %788 = vmatprep.subr.mxu0 0.0
        %789 = vmatpush1.msra.mxu0 0.0
        %790 = vmatprep.subr.mxu0 0.0
        %791 = vmatpush1.msra.mxu0 0.0
        %792 = vmatprep.subr.mxu0 0.0
        %793 = vmatpush1.msra.mxu0 0.0
        %794 = vmatprep.subr.mxu0 0.0
        %795 = vmatpush1.msra.mxu0 0.0
        %796 = vmatprep.subr.mxu0 0.0
        %797 = vmatpush1.msra.mxu0 0.0
        %798 = vmatprep.subr.mxu0 0.0
        %799 = vmatpush1.msra.mxu0 0.0
        %800 = vmatprep.subr.mxu0 0.0
        %801 = vmatpush1.msra.mxu0 0.0
        %802 = vmatprep.subr.mxu0 0.0
        %803 = vmatpush1.msra.mxu0 0.0
        %804 = vmatprep.subr.mxu0 0.0
        %805 = vmatpush1.msra.mxu0 0.0
        %806 = vmatprep.subr.mxu0 0.0
        %807 = vmatpush1.msra.mxu0 0.0
        %808 = vmatprep.subr.mxu0 0.0
        %809 = vmatpush1.msra.mxu0 0.0
        %810 = vmatprep.subr.mxu0 0.0
        %811 = vmatpush1.msra.mxu0 0.0
        %812 = vmatprep.subr.mxu0 0.0
        %813 = vmatpush1.msra.mxu0 0.0
        %814 = vmatprep.subr.mxu0 0.0
        %815 = vmatpush1.msra.mxu0 0.0
        %816 = vmatprep.subr.mxu0 0.0
        %817 = vmatpush1.msra.mxu0 0.0
        %818 = vmatprep.subr.mxu0 0.0
        %819 = vmatpush1.msra.mxu0 0.0
        %820 = vmatprep.subr.mxu0 0.0
        %821 = vmatpush1.msra.mxu0 0.0
        %822 = vmatprep.subr.mxu0 0.0
        %823 = vmatpush1.msra.mxu0 0.0
        %824 = vmatprep.subr.mxu0 0.0
        %825 = vmatpush1.msra.mxu0 0.0
        %826 = vmatprep.subr.mxu0 0.0
        %827 = vmatpush1.msra.mxu0 0.0
        %828 = vmatprep.subr.mxu0 0.0
        %829 = vmatpush1.msra.mxu0 0.0
        %830 = vmatprep.mubr.f32.mxu0 0.0
        %831 = vmatmul.mubr.f32.gmra.mrb[0].mxu0 %v693
        %v832 = vpop.f32.mrb[0].mxu0
        %v833 = vadd.f32 %v689, %v832
        %v834 = vpop.f32.mrb[0].mxu0
        %v835 = vadd.f32 %v689, %v834
        %836 = vdwg.mxu0
        %837 = vmatprep.subr.mxu0 0.0
        %838 = vmatpush1.msra.mxu0 %v644
        %839 = vmatprep.subr.mxu0 0.0
        %840 = vmatpush1.msra.mxu0 %v649
        %841 = vmatprep.subr.mxu0 0.0
        %842 = vmatpush1.msra.mxu0 %v654
        %843 = vmatprep.subr.mxu0 0.0
        %844 = vmatpush1.msra.mxu0 %v659
        %845 = vmatprep.subr.mxu0 0.0
        %846 = vmatpush1.msra.mxu0 %v664
        %847 = vmatprep.subr.mxu0 0.0
        %848 = vmatpush1.msra.mxu0 %v669
        %849 = vmatprep.subr.mxu0 0.0
        %850 = vmatpush1.msra.mxu0 %v674
        %851 = vmatprep.subr.mxu0 0.0
        %852 = vmatpush1.msra.mxu0 %v679
        %853 = vmatprep.subr.mxu0 0.0
        %854 = vmatpush1.msra.mxu0 %v684
        %855 = vmatprep.subr.mxu0 0.0
        %856 = vmatpush1.msra.mxu0 0.0
        %857 = vmatprep.subr.mxu0 0.0
        %858 = vmatpush1.msra.mxu0 0.0
        %859 = vmatprep.subr.mxu0 0.0
        %860 = vmatpush1.msra.mxu0 0.0
        %861 = vmatprep.subr.mxu0 0.0
        %862 = vmatpush1.msra.mxu0 0.0
        %863 = vmatprep.subr.mxu0 0.0
        %864 = vmatpush1.msra.mxu0 0.0
        %865 = vmatprep.subr.mxu0 0.0
        %866 = vmatpush1.msra.mxu0 0.0
        %867 = vmatprep.subr.mxu0 0.0
        %868 = vmatpush1.msra.mxu0 0.0
        %869 = vmatprep.subr.mxu0 0.0
        %870 = vmatpush1.msra.mxu0 0.0
        %871 = vmatprep.subr.mxu0 0.0
        %872 = vmatpush1.msra.mxu0 0.0
        %873 = vmatprep.subr.mxu0 0.0
        %874 = vmatpush1.msra.mxu0 0.0
        %875 = vmatprep.subr.mxu0 0.0
        %876 = vmatpush1.msra.mxu0 0.0
        %877 = vmatprep.subr.mxu0 0.0
        %878 = vmatpush1.msra.mxu0 0.0
        %879 = vmatprep.subr.mxu0 0.0
        %880 = vmatpush1.msra.mxu0 0.0
        %881 = vmatprep.subr.mxu0 0.0
        %882 = vmatpush1.msra.mxu0 0.0
        %883 = vmatprep.subr.mxu0 0.0
        %884 = vmatpush1.msra.mxu0 0.0
        %885 = vmatprep.subr.mxu0 0.0
        %886 = vmatpush1.msra.mxu0 0.0
        %887 = vmatprep.subr.mxu0 0.0
        %888 = vmatpush1.msra.mxu0 0.0
        %889 = vmatprep.subr.mxu0 0.0
        %890 = vmatpush1.msra.mxu0 0.0
        %891 = vmatprep.subr.mxu0 0.0
        %892 = vmatpush1.msra.mxu0 0.0
        %893 = vmatprep.subr.mxu0 0.0
        %894 = vmatpush1.msra.mxu0 0.0
        %895 = vmatprep.subr.mxu0 0.0
        %896 = vmatpush1.msra.mxu0 0.0
        %897 = vmatprep.subr.mxu0 0.0
        %898 = vmatpush1.msra.mxu0 0.0
        %899 = vmatprep.subr.mxu0 0.0
        %900 = vmatpush1.msra.mxu0 0.0
        %901 = vmatprep.mubr.f32.mxu0 0.0
        %902 = vmatmul.mubr.f32.gmra.mrb[0].mxu0 %v693
        %v903 = vpop.f32.mrb[0].mxu0
        %v904 = vadd.f32 %v689, %v903
        %v905 = vpop.f32.mrb[0].mxu0
        %906 = vdwg.mxu0
        %v907 = vmax.f32 %v762, 0.0
        %v908 = vmax.f32 %v764, 0.0
        %v909 = vmax.f32 %v833, 0.0
        %v910 = vmax.f32 %v835, 0.0
        %v911 = vmax.f32 %v904, 0.0
        %v912 = vld [vmem:[%s1] sm:$0x1f]
        %v914 = vlaneseq
        %v915 = vshrl.u32 %v914, 7
        %v916 = vsub.s32 0, %v915
        %v917 = vrot.slane %v912, %v916
        %v918 = vlaneseq
        %v919 = vshrl.u32 %v918, 7
        %v920 = vsub.s32 1, %v919
        %v921 = vrot.slane %v912, %v920
        %v922 = vlaneseq
        %v923 = vshrl.u32 %v922, 7
        %v924 = vsub.s32 2, %v923
        %v925 = vrot.slane %v912, %v924
        %v926 = vlaneseq
        %v927 = vshrl.u32 %v926, 7
        %v928 = vsub.s32 3, %v927
        %v929 = vrot.slane %v912, %v928
        %v930 = vlaneseq
        %v931 = vshrl.u32 %v930, 7
        %v932 = vsub.s32 4, %v931
        %v933 = vrot.slane %v912, %v932
        %v939 = vmul.f32 %v907, %v917
        %v940 = vmul.f32 %v908, %v921
        %v941 = vmul.f32 %v909, %v925
        %v942 = vmul.f32 %v910, %v929
        %v943 = vmul.f32 %v911, %v933
        %vm944 = vcmask 154624
        %945 = vst.msk [vmem:[#allocation2] sm:$0xff] %vm944, 0.0
        %949 = vrot.lane.b32.xlu0 %v939, 19
        %v950 = vpop.permute.xlu0 %949
        %951 = vrot.lane.b32.xlu0 %v940, 19
        %v952 = vpop.permute.xlu0 %951
        %953 = vrot.lane.b32.xlu0 %v941, 19
        %v954 = vpop.permute.xlu0 %953
        %v955 = vsel %vm944, %v950, %v952
        %v956 = vsel %vm944, %v952, %v954
        %vm960 = vcmask 1047704
        %961 = vst.msk [vmem:[#allocation2] sm:$0xff] %vm960, %v950
        %962 = vst [vmem:[#allocation2 + $0x8] sm:$0xff] %v955
        %vm963 = vcmask 416768
        %964 = vst.msk [vmem:[#allocation2 + $0x10] sm:$0xff] %vm963, %v956
        %vm965 = vcmask 703896
        %966 = vst.msk [vmem:[#allocation2 + $0x10] sm:$0xff] %vm965, 0.0
        %s967 = scalar_lea.vmem [#allocation2], 24
        %968 = vst.msk [vmem:[%s967] sm:$0xff] %vm944, 0.0
        %971 = vrot.lane.b32.xlu0 %v941, 115
        %v972 = vpop.permute.xlu0 %971
        %973 = vrot.lane.b32.xlu0 %v942, 115
        %v974 = vpop.permute.xlu0 %973
        %975 = vrot.lane.b32.xlu0 %v943, 115
        %v976 = vpop.permute.xlu0 %975
        %vm977 = vcmask 941056
        %v978 = vsel %vm977, %v972, %v974
        %v979 = vsel %vm977, %v974, %v976
        %983 = vst.msk [vmem:[%s967] sm:$0xff] %vm960, %v978
        %984 = vst [vmem:[%s967 + $0x8] sm:$0xff] %v979
        %985 = vst.msk [vmem:[%s967 + $0x10] sm:$0xff] %vm963, %v976
        %986 = vst.msk [vmem:[%s967 + $0x10] sm:$0xff] %vm965, 0.0
        %v987 = vld [vmem:[#allocation2] sm:$0xff]
        %v988 = vld [vmem:[#allocation2 + $0x8] sm:$0xff]
        %v989 = vld [vmem:[#allocation2 + $0x10] sm:$0xff]
        %990 = vst [vmem:[#allocation3] sm:$0xff] %v987
        %991 = vst [vmem:[#allocation3 + $0x8] sm:$0xff] %v988
        %992 = vst.msk [vmem:[#allocation3 + $0x10] sm:$0xff] %vm278, %v989
        %v993 = vld [vmem:[#allocation2] sm:$0xff]
        %v994 = vld [vmem:[#allocation2 + $0x8] sm:$0xff]
        %v995 = vld [vmem:[#allocation2 + $0x10] sm:$0xff]
        %999 = vrot.lane.b32.xlu0 %v993, 127
        %v1000 = vpop.permute.xlu0 %999
        %1001 = vrot.lane.b32.xlu0 %v994, 127
        %v1002 = vpop.permute.xlu0 %1001
        %1003 = vrot.lane.b32.xlu0 %v995, 127
        %v1004 = vpop.permute.xlu0 %1003
        %v1005 = vsel %vm292, %v1000, %v1002
        %v1006 = vsel %vm292, %v1002, %v1004
        %1010 = vst [vmem:[#allocation3 + $0x28] sm:$0xff] %v1005
        %1011 = vst [vmem:[#allocation3 + $0x30] sm:$0xff] %v1006
        %1012 = vst.msk [vmem:[#allocation3 + $0x38] sm:$0xff] %vm278, %v1004
        %v1013 = vld [vmem:[#allocation2] sm:$0xff]
        %v1014 = vld [vmem:[#allocation2 + $0x8] sm:$0xff]
        %v1015 = vld [vmem:[#allocation2 + $0x10] sm:$0xff]
        %1019 = vrot.lane.b32.xlu0 %v1013, 126
        %v1020 = vpop.permute.xlu0 %1019
        %1021 = vrot.lane.b32.xlu0 %v1014, 126
        %v1022 = vpop.permute.xlu0 %1021
        %1023 = vrot.lane.b32.xlu0 %v1015, 126
        %v1024 = vpop.permute.xlu0 %1023
        %v1025 = vsel %vm313, %v1020, %v1022
        %v1026 = vsel %vm313, %v1022, %v1024
        %1030 = vst [vmem:[#allocation3 + $0x50] sm:$0xff] %v1025
        %1031 = vst [vmem:[#allocation3 + $0x58] sm:$0xff] %v1026
        %1032 = vst.msk [vmem:[#allocation3 + $0x60] sm:$0xff] %vm278, %v1024
        %v1033 = vld [vmem:[#allocation2] sm:$0xff]
        %v1034 = vld [vmem:[#allocation2 + $0x8] sm:$0xff]
        %v1035 = vld [vmem:[#allocation2 + $0x10] sm:$0xff]
        %1039 = vrot.lane.b32.xlu0 %v1033, 110
        %v1040 = vpop.permute.xlu0 %1039
        %1041 = vrot.lane.b32.xlu0 %v1034, 110
        %v1042 = vpop.permute.xlu0 %1041
        %1043 = vrot.lane.b32.xlu0 %v1035, 110
        %v1044 = vpop.permute.xlu0 %1043
        %v1045 = vsel %vm334, %v1040, %v1042
        %v1046 = vsel %vm334, %v1042, %v1044
        %1050 = vst [vmem:[#allocation3 + $0x78] sm:$0xff] %v1045
        %1051 = vst [vmem:[#allocation3 + $0x80] sm:$0xff] %v1046
        %1052 = vst.msk [vmem:[#allocation3 + $0x88] sm:$0xff] %vm278, %v1044
        %v1053 = vld [vmem:[#allocation2] sm:$0xff]
        %v1054 = vld [vmem:[#allocation2 + $0x8] sm:$0xff]
        %v1055 = vld [vmem:[#allocation2 + $0x10] sm:$0xff]
        %1059 = vrot.lane.b32.xlu0 %v1053, 109
        %v1060 = vpop.permute.xlu0 %1059
        %1061 = vrot.lane.b32.xlu0 %v1054, 109
        %v1062 = vpop.permute.xlu0 %1061
        %1063 = vrot.lane.b32.xlu0 %v1055, 109
        %v1064 = vpop.permute.xlu0 %1063
        %v1065 = vsel %vm355, %v1060, %v1062
        %v1066 = vsel %vm355, %v1062, %v1064
        %1070 = vst [vmem:[#allocation3 + $0xa0] sm:$0xff] %v1065
        %1071 = vst [vmem:[#allocation3 + $0xa8] sm:$0xff] %v1066
        %1072 = vst.msk [vmem:[#allocation3 + $0xb0] sm:$0xff] %vm278, %v1064
        %v1073 = vld [vmem:[#allocation2] sm:$0xff]
        %v1074 = vld [vmem:[#allocation2 + $0x8] sm:$0xff]
        %v1075 = vld [vmem:[#allocation2 + $0x10] sm:$0xff]
        %1079 = vrot.lane.b32.xlu0 %v1073, 108
        %v1080 = vpop.permute.xlu0 %1079
        %1081 = vrot.lane.b32.xlu0 %v1074, 108
        %v1082 = vpop.permute.xlu0 %1081
        %1083 = vrot.lane.b32.xlu0 %v1075, 108
        %v1084 = vpop.permute.xlu0 %1083
        %v1085 = vsel %vm376, %v1080, %v1082
        %v1086 = vsel %vm376, %v1082, %v1084
        %1090 = vst [vmem:[#allocation3 + $0xc8] sm:$0xff] %v1085
        %1091 = vst [vmem:[#allocation3 + $0xd0] sm:$0xff] %v1086
        %1092 = vst.msk [vmem:[#allocation3 + $0xd8] sm:$0xff] %vm278, %v1084
        %v1093 = vld [vmem:[#allocation2] sm:$0xff]
        %v1094 = vld [vmem:[#allocation2 + $0x8] sm:$0xff]
        %v1095 = vld [vmem:[#allocation2 + $0x10] sm:$0xff]
        %1099 = vrot.lane.b32.xlu0 %v1093, 92
        %v1100 = vpop.permute.xlu0 %1099
        %1101 = vrot.lane.b32.xlu0 %v1094, 92
        %v1102 = vpop.permute.xlu0 %1101
        %1103 = vrot.lane.b32.xlu0 %v1095, 92
        %v1104 = vpop.permute.xlu0 %1103
        %v1105 = vsel %vm397, %v1100, %v1102
        %v1106 = vsel %vm397, %v1102, %v1104
        %1110 = vst [vmem:[#allocation3 + $0xf0] sm:$0xff] %v1105
        %1111 = vst [vmem:[#allocation3 + $0xf8] sm:$0xff] %v1106
        %1112 = vst.msk [vmem:[#allocation3 + $0x100] sm:$0xff] %vm278, %v1104
        %v1113 = vld [vmem:[#allocation2] sm:$0xff]
        %v1114 = vld [vmem:[#allocation2 + $0x8] sm:$0xff]
        %v1115 = vld [vmem:[#allocation2 + $0x10] sm:$0xff]
        %1119 = vrot.lane.b32.xlu0 %v1113, 91
        %v1120 = vpop.permute.xlu0 %1119
        %1121 = vrot.lane.b32.xlu0 %v1114, 91
        %v1122 = vpop.permute.xlu0 %1121
        %1123 = vrot.lane.b32.xlu0 %v1115, 91
        %v1124 = vpop.permute.xlu0 %1123
        %v1125 = vsel %vm418, %v1120, %v1122
        %v1126 = vsel %vm418, %v1122, %v1124
        %1130 = vst [vmem:[#allocation3 + $0x118] sm:$0xff] %v1125
        %1131 = vst [vmem:[#allocation3 + $0x120] sm:$0xff] %v1126
        %1132 = vst.msk [vmem:[#allocation3 + $0x128] sm:$0xff] %vm278, %v1124
        %v1133 = vld [vmem:[#allocation2] sm:$0xff]
        %v1134 = vld [vmem:[#allocation2 + $0x8] sm:$0xff]
        %v1135 = vld [vmem:[#allocation2 + $0x10] sm:$0xff]
        %1139 = vrot.lane.b32.xlu0 %v1133, 90
        %v1140 = vpop.permute.xlu0 %1139
        %1141 = vrot.lane.b32.xlu0 %v1134, 90
        %v1142 = vpop.permute.xlu0 %1141
        %1143 = vrot.lane.b32.xlu0 %v1135, 90
        %v1144 = vpop.permute.xlu0 %1143
        %v1145 = vsel %vm439, %v1140, %v1142
        %v1146 = vsel %vm439, %v1142, %v1144
        %1150 = vst [vmem:[#allocation3 + $0x140] sm:$0xff] %v1145
        %1151 = vst [vmem:[#allocation3 + $0x148] sm:$0xff] %v1146
        %1152 = vst.msk [vmem:[#allocation3 + $0x150] sm:$0xff] %vm278, %v1144
        %v1153 = vld [vmem:[%s967] sm:$0xff]
        %v1154 = vld [vmem:[%s967 + $0x8] sm:$0xff]
        %v1155 = vld [vmem:[%s967 + $0x10] sm:$0xff]
        %1159 = vrot.lane.b32.xlu0 %v1153, 32
        %v1160 = vpop.permute.xlu0 %1159
        %1161 = vrot.lane.b32.xlu0 %v1154, 32
        %v1162 = vpop.permute.xlu0 %1161
        %1163 = vrot.lane.b32.xlu0 %v1155, 32
        %v1164 = vpop.permute.xlu0 %1163
        %v1165 = vsel %vm278, %v1160, %v1162
        %v1166 = vsel %vm278, %v1162, %v1164
        %1170 = vst.msk [vmem:[#allocation3 + $0x10] sm:$0xff] %vm466, %v1160
        %1171 = vst [vmem:[#allocation3 + $0x18] sm:$0xff] %v1165
        %1172 = vst.msk [vmem:[#allocation3 + $0x20] sm:$0xff] %vm469, %v1166
        %v1173 = vld [vmem:[%s967] sm:$0xff]
        %v1174 = vld [vmem:[%s967 + $0x8] sm:$0xff]
        %v1175 = vld [vmem:[%s967 + $0x10] sm:$0xff]
        %1179 = vrot.lane.b32.xlu0 %v1173, 31
        %v1180 = vpop.permute.xlu0 %1179
        %1181 = vrot.lane.b32.xlu0 %v1174, 31
        %v1182 = vpop.permute.xlu0 %1181
        %1183 = vrot.lane.b32.xlu0 %v1175, 31
        %v1184 = vpop.permute.xlu0 %1183
        %v1185 = vsel %vm483, %v1180, %v1182
        %v1186 = vsel %vm483, %v1182, %v1184
        %1190 = vst.msk [vmem:[#allocation3 + $0x38] sm:$0xff] %vm466, %v1180
        %1191 = vst [vmem:[#allocation3 + $0x40] sm:$0xff] %v1185
        %1192 = vst.msk [vmem:[#allocation3 + $0x48] sm:$0xff] %vm469, %v1186
        %v1193 = vld [vmem:[%s967] sm:$0xff]
        %v1194 = vld [vmem:[%s967 + $0x8] sm:$0xff]
        %v1195 = vld [vmem:[%s967 + $0x10] sm:$0xff]
        %1199 = vrot.lane.b32.xlu0 %v1193, 30
        %v1200 = vpop.permute.xlu0 %1199
        %1201 = vrot.lane.b32.xlu0 %v1194, 30
        %v1202 = vpop.permute.xlu0 %1201
        %1203 = vrot.lane.b32.xlu0 %v1195, 30
        %v1204 = vpop.permute.xlu0 %1203
        %v1205 = vsel %vm504, %v1200, %v1202
        %v1206 = vsel %vm504, %v1202, %v1204
        %1210 = vst.msk [vmem:[#allocation3 + $0x60] sm:$0xff] %vm466, %v1200
        %1211 = vst [vmem:[#allocation3 + $0x68] sm:$0xff] %v1205
        %1212 = vst.msk [vmem:[#allocation3 + $0x70] sm:$0xff] %vm469, %v1206
        %v1213 = vld [vmem:[%s967] sm:$0xff]
        %v1214 = vld [vmem:[%s967 + $0x8] sm:$0xff]
        %v1215 = vld [vmem:[%s967 + $0x10] sm:$0xff]
        %1219 = vrot.lane.b32.xlu0 %v1213, 14
        %v1220 = vpop.permute.xlu0 %1219
        %1221 = vrot.lane.b32.xlu0 %v1214, 14
        %v1222 = vpop.permute.xlu0 %1221
        %1223 = vrot.lane.b32.xlu0 %v1215, 14
        %v1224 = vpop.permute.xlu0 %1223
        %v1225 = vsel %vm525, %v1220, %v1222
        %v1226 = vsel %vm525, %v1222, %v1224
        %1230 = vst.msk [vmem:[#allocation3 + $0x88] sm:$0xff] %vm466, %v1220
        %1231 = vst [vmem:[#allocation3 + $0x90] sm:$0xff] %v1225
        %1232 = vst.msk [vmem:[#allocation3 + $0x98] sm:$0xff] %vm469, %v1226
        %v1233 = vld [vmem:[%s967] sm:$0xff]
        %v1234 = vld [vmem:[%s967 + $0x8] sm:$0xff]
        %v1235 = vld [vmem:[%s967 + $0x10] sm:$0xff]
        %1239 = vrot.lane.b32.xlu0 %v1233, 13
        %v1240 = vpop.permute.xlu0 %1239
        %1241 = vrot.lane.b32.xlu0 %v1234, 13
        %v1242 = vpop.permute.xlu0 %1241
        %1243 = vrot.lane.b32.xlu0 %v1235, 13
        %v1244 = vpop.permute.xlu0 %1243
        %v1245 = vsel %vm546, %v1240, %v1242
        %v1246 = vsel %vm546, %v1242, %v1244
        %1250 = vst.msk [vmem:[#allocation3 + $0xb0] sm:$0xff] %vm466, %v1240
        %1251 = vst [vmem:[#allocation3 + $0xb8] sm:$0xff] %v1245
        %1252 = vst.msk [vmem:[#allocation3 + $0xc0] sm:$0xff] %vm469, %v1246
        %v1253 = vld [vmem:[%s967] sm:$0xff]
        %v1254 = vld [vmem:[%s967 + $0x8] sm:$0xff]
        %v1255 = vld [vmem:[%s967 + $0x10] sm:$0xff]
        %1259 = vrot.lane.b32.xlu0 %v1253, 12
        %v1260 = vpop.permute.xlu0 %1259
        %1261 = vrot.lane.b32.xlu0 %v1254, 12
        %v1262 = vpop.permute.xlu0 %1261
        %1263 = vrot.lane.b32.xlu0 %v1255, 12
        %v1264 = vpop.permute.xlu0 %1263
        %v1265 = vsel %vm567, %v1260, %v1262
        %v1266 = vsel %vm567, %v1262, %v1264
        %1270 = vst.msk [vmem:[#allocation3 + $0xd8] sm:$0xff] %vm466, %v1260
        %1271 = vst [vmem:[#allocation3 + $0xe0] sm:$0xff] %v1265
        %1272 = vst.msk [vmem:[#allocation3 + $0xe8] sm:$0xff] %vm469, %v1266
        %v1273 = vld [vmem:[%s967] sm:$0xff]
        %v1274 = vld [vmem:[%s967 + $0x8] sm:$0xff]
        %v1275 = vld [vmem:[%s967 + $0x10] sm:$0xff]
        %1279 = vrot.lane.b32.xlu0 %v1273, 124
        %v1280 = vpop.permute.xlu0 %1279
        %1281 = vrot.lane.b32.xlu0 %v1274, 124
        %v1282 = vpop.permute.xlu0 %1281
        %1283 = vrot.lane.b32.xlu0 %v1275, 124
        %v1284 = vpop.permute.xlu0 %1283
        %v1285 = vsel %vm588, %v1280, %v1282
        %v1286 = vsel %vm588, %v1282, %v1284
        %1290 = vst.msk [vmem:[#allocation3 + $0x100] sm:$0xff] %vm466, %v1285
        %1291 = vst [vmem:[#allocation3 + $0x108] sm:$0xff] %v1286
        %1292 = vst.msk [vmem:[#allocation3 + $0x110] sm:$0xff] %vm469, %v1284
        %v1293 = vld [vmem:[%s967] sm:$0xff]
        %v1294 = vld [vmem:[%s967 + $0x8] sm:$0xff]
        %v1295 = vld [vmem:[%s967 + $0x10] sm:$0xff]
        %1299 = vrot.lane.b32.xlu0 %v1293, 123
        %v1300 = vpop.permute.xlu0 %1299
        %1301 = vrot.lane.b32.xlu0 %v1294, 123
        %v1302 = vpop.permute.xlu0 %1301
        %1303 = vrot.lane.b32.xlu0 %v1295, 123
        %v1304 = vpop.permute.xlu0 %1303
        %v1305 = vsel %vm609, %v1300, %v1302
        %v1306 = vsel %vm609, %v1302, %v1304
        %1310 = vst.msk [vmem:[#allocation3 + $0x128] sm:$0xff] %vm466, %v1305
        %1311 = vst [vmem:[#allocation3 + $0x130] sm:$0xff] %v1306
        %1312 = vst.msk [vmem:[#allocation3 + $0x138] sm:$0xff] %vm469, %v1304
        %v1313 = vld [vmem:[%s967] sm:$0xff]
        %v1314 = vld [vmem:[%s967 + $0x8] sm:$0xff]
        %v1315 = vld [vmem:[%s967 + $0x10] sm:$0xff]
        %1319 = vrot.lane.b32.xlu0 %v1313, 122
        %v1320 = vpop.permute.xlu0 %1319
        %1321 = vrot.lane.b32.xlu0 %v1314, 122
        %v1322 = vpop.permute.xlu0 %1321
        %1323 = vrot.lane.b32.xlu0 %v1315, 122
        %v1324 = vpop.permute.xlu0 %1323
        %v1325 = vsel %vm630, %v1320, %v1322
        %v1326 = vsel %vm630, %v1322, %v1324
        %1330 = vst.msk [vmem:[#allocation3 + $0x150] sm:$0xff] %vm466, %v1325
        %1331 = vst [vmem:[#allocation3 + $0x158] sm:$0xff] %v1326
        %1332 = vst.msk [vmem:[#allocation3 + $0x160] sm:$0xff] %vm469, %v1324
        %v1333 = vld [vmem:[%s4] sm:$0xff]
        %v1334 = vld [vmem:[#allocation3] sm:$0xff]
        %v1335 = vld [vmem:[#allocation3 + $0x8] sm:$0xff]
        %v1336 = vld [vmem:[#allocation3 + $0x10] sm:$0xff]
        %v1337 = vld [vmem:[#allocation3 + $0x18] sm:$0xff]
        %v1338 = vld [vmem:[#allocation3 + $0x20] sm:$0xff]
        %v1339 = vld [vmem:[#allocation3 + $0x28] sm:$0xff]
        %v1340 = vld [vmem:[#allocation3 + $0x30] sm:$0xff]
        %v1341 = vld [vmem:[#allocation3 + $0x38] sm:$0xff]
        %v1342 = vld [vmem:[#allocation3 + $0x40] sm:$0xff]
        %v1343 = vld [vmem:[#allocation3 + $0x48] sm:$0xff]
        %v1344 = vld [vmem:[#allocation3 + $0x50] sm:$0xff]
        %v1345 = vld [vmem:[#allocation3 + $0x58] sm:$0xff]
        %v1346 = vld [vmem:[#allocation3 + $0x60] sm:$0xff]
        %v1347 = vld [vmem:[#allocation3 + $0x68] sm:$0xff]
        %v1348 = vld [vmem:[#allocation3 + $0x70] sm:$0xff]
        %v1349 = vld [vmem:[#allocation3 + $0x78] sm:$0xff]
        %v1350 = vld [vmem:[#allocation3 + $0x80] sm:$0xff]
        %v1351 = vld [vmem:[#allocation3 + $0x88] sm:$0xff]
        %v1352 = vld [vmem:[#allocation3 + $0x90] sm:$0xff]
        %v1353 = vld [vmem:[#allocation3 + $0x98] sm:$0xff]
        %v1354 = vld [vmem:[#allocation3 + $0xa0] sm:$0xff]
        %v1355 = vld [vmem:[#allocation3 + $0xa8] sm:$0xff]
        %v1356 = vld [vmem:[#allocation3 + $0xb0] sm:$0xff]
        %v1357 = vld [vmem:[#allocation3 + $0xb8] sm:$0xff]
        %v1358 = vld [vmem:[#allocation3 + $0xc0] sm:$0xff]
        %v1359 = vld [vmem:[#allocation3 + $0xc8] sm:$0xff]
        %v1360 = vld [vmem:[#allocation3 + $0xd0] sm:$0xff]
        %v1361 = vld [vmem:[#allocation3 + $0xd8] sm:$0xff]
        %v1362 = vld [vmem:[#allocation3 + $0xe0] sm:$0xff]
        %v1363 = vld [vmem:[#allocation3 + $0xe8] sm:$0xff]
        %v1364 = vld [vmem:[#allocation3 + $0xf0] sm:$0xff]
        %v1365 = vld [vmem:[#allocation3 + $0xf8] sm:$0xff]
        %v1366 = vld [vmem:[#allocation3 + $0x100] sm:$0xff]
        %v1367 = vld [vmem:[#allocation3 + $0x108] sm:$0xff]
        %v1368 = vld [vmem:[#allocation3 + $0x110] sm:$0xff]
        %v1369 = vld [vmem:[#allocation3 + $0x118] sm:$0xff]
        %v1370 = vld [vmem:[#allocation3 + $0x120] sm:$0xff]
        %v1371 = vld [vmem:[#allocation3 + $0x128] sm:$0xff]
        %v1372 = vld [vmem:[#allocation3 + $0x130] sm:$0xff]
        %v1373 = vld [vmem:[#allocation3 + $0x138] sm:$0xff]
        %v1374 = vld [vmem:[#allocation3 + $0x140] sm:$0xff]
        %v1375 = vld [vmem:[#allocation3 + $0x148] sm:$0xff]
        %v1376 = vld [vmem:[#allocation3 + $0x150] sm:$0xff]
        %v1377 = vld [vmem:[#allocation3 + $0x158] sm:$0xff]
        %v1378 = vld [vmem:[#allocation3 + $0x160] sm:$0xff]
        %v1379 = vld [vmem:[%s5] sm:$0xff]
        %1381 = vset.pattern.permute.xlu0 0
        %1382 = vperm.xlu0 %1381, %v1379
        %v1383 = vpop.permute.xlu0 %1382
        %v1386 = vsel %vm691, %v1333, 0
        %1388 = vmatprep.subr.mxu0 %v1335
        %1389 = vmatpush1.msra.mxu0 %v1334
        %1390 = vmatprep.subr.mxu0 %v1340
        %1391 = vmatpush1.msra.mxu0 %v1339
        %1392 = vmatprep.subr.mxu0 %v1345
        %1393 = vmatpush1.msra.mxu0 %v1344
        %1394 = vmatprep.subr.mxu0 %v1350
        %1395 = vmatpush1.msra.mxu0 %v1349
        %1396 = vmatprep.subr.mxu0 %v1355
        %1397 = vmatpush1.msra.mxu0 %v1354
        %1398 = vmatprep.subr.mxu0 %v1360
        %1399 = vmatpush1.msra.mxu0 %v1359
        %1400 = vmatprep.subr.mxu0 %v1365
        %1401 = vmatpush1.msra.mxu0 %v1364
        %1402 = vmatprep.subr.mxu0 %v1370
        %1403 = vmatpush1.msra.mxu0 %v1369
        %1404 = vmatprep.subr.mxu0 %v1375
        %1405 = vmatpush1.msra.mxu0 %v1374
        %1406 = vmatprep.subr.mxu0 0.0
        %1407 = vmatpush1.msra.mxu0 0.0
        %1408 = vmatprep.subr.mxu0 0.0
        %1409 = vmatpush1.msra.mxu0 0.0
        %1410 = vmatprep.subr.mxu0 0.0
        %1411 = vmatpush1.msra.mxu0 0.0
        %1412 = vmatprep.subr.mxu0 0.0
        %1413 = vmatpush1.msra.mxu0 0.0
        %1414 = vmatprep.subr.mxu0 0.0
        %1415 = vmatpush1.msra.mxu0 0.0
        %1416 = vmatprep.subr.mxu0 0.0
        %1417 = vmatpush1.msra.mxu0 0.0
        %1418 = vmatprep.subr.mxu0 0.0
        %1419 = vmatpush1.msra.mxu0 0.0
        %1420 = vmatprep.subr.mxu0 0.0
        %1421 = vmatpush1.msra.mxu0 0.0
        %1422 = vmatprep.subr.mxu0 0.0
        %1423 = vmatpush1.msra.mxu0 0.0
        %1424 = vmatprep.subr.mxu0 0.0
        %1425 = vmatpush1.msra.mxu0 0.0
        %1426 = vmatprep.subr.mxu0 0.0
        %1427 = vmatpush1.msra.mxu0 0.0
        %1428 = vmatprep.subr.mxu0 0.0
        %1429 = vmatpush1.msra.mxu0 0.0
        %1430 = vmatprep.subr.mxu0 0.0
        %1431 = vmatpush1.msra.mxu0 0.0
        %1432 = vmatprep.subr.mxu0 0.0
        %1433 = vmatpush1.msra.mxu0 0.0
        %1434 = vmatprep.subr.mxu0 0.0
        %1435 = vmatpush1.msra.mxu0 0.0
        %1436 = vmatprep.subr.mxu0 0.0
        %1437 = vmatpush1.msra.mxu0 0.0
        %1438 = vmatprep.subr.mxu0 0.0
        %1439 = vmatpush1.msra.mxu0 0.0
        %1440 = vmatprep.subr.mxu0 0.0
        %1441 = vmatpush1.msra.mxu0 0.0
        %1442 = vmatprep.subr.mxu0 0.0
        %1443 = vmatpush1.msra.mxu0 0.0
        %1444 = vmatprep.subr.mxu0 0.0
        %1445 = vmatpush1.msra.mxu0 0.0
        %1446 = vmatprep.subr.mxu0 0.0
        %1447 = vmatpush1.msra.mxu0 0.0
        %1448 = vmatprep.subr.mxu0 0.0
        %1449 = vmatpush1.msra.mxu0 0.0
        %1450 = vmatprep.subr.mxu0 0.0
        %1451 = vmatpush1.msra.mxu0 0.0
        %1452 = vmatprep.mubr.f32.mxu0 0.0
        %1453 = vmatmul.mubr.f32.gmra.mrb[0].mxu0 %v1386
        %v1454 = vpop.f32.mrb[0].mxu0
        %v1455 = vadd.f32 %v1383, %v1454
        %v1456 = vpop.f32.mrb[0].mxu0
        %v1457 = vadd.f32 %v1383, %v1456
        %1458 = vdwg.mxu0
        %1459 = vmatprep.subr.mxu0 %v1337
        %1460 = vmatpush1.msra.mxu0 %v1336
        %1461 = vmatprep.subr.mxu0 %v1342
        %1462 = vmatpush1.msra.mxu0 %v1341
        %1463 = vmatprep.subr.mxu0 %v1347
        %1464 = vmatpush1.msra.mxu0 %v1346
        %1465 = vmatprep.subr.mxu0 %v1352
        %1466 = vmatpush1.msra.mxu0 %v1351
        %1467 = vmatprep.subr.mxu0 %v1357
        %1468 = vmatpush1.msra.mxu0 %v1356
        %1469 = vmatprep.subr.mxu0 %v1362
        %1470 = vmatpush1.msra.mxu0 %v1361
        %1471 = vmatprep.subr.mxu0 %v1367
        %1472 = vmatpush1.msra.mxu0 %v1366
        %1473 = vmatprep.subr.mxu0 %v1372
        %1474 = vmatpush1.msra.mxu0 %v1371
        %1475 = vmatprep.subr.mxu0 %v1377
        %1476 = vmatpush1.msra.mxu0 %v1376
        %1477 = vmatprep.subr.mxu0 0.0
        %1478 = vmatpush1.msra.mxu0 0.0
        %1479 = vmatprep.subr.mxu0 0.0
        %1480 = vmatpush1.msra.mxu0 0.0
        %1481 = vmatprep.subr.mxu0 0.0
        %1482 = vmatpush1.msra.mxu0 0.0
        %1483 = vmatprep.subr.mxu0 0.0
        %1484 = vmatpush1.msra.mxu0 0.0
        %1485 = vmatprep.subr.mxu0 0.0
        %1486 = vmatpush1.msra.mxu0 0.0
        %1487 = vmatprep.subr.mxu0 0.0
        %1488 = vmatpush1.msra.mxu0 0.0
        %1489 = vmatprep.subr.mxu0 0.0
        %1490 = vmatpush1.msra.mxu0 0.0
        %1491 = vmatprep.subr.mxu0 0.0
        %1492 = vmatpush1.msra.mxu0 0.0
        %1493 = vmatprep.subr.mxu0 0.0
        %1494 = vmatpush1.msra.mxu0 0.0
        %1495 = vmatprep.subr.mxu0 0.0
        %1496 = vmatpush1.msra.mxu0 0.0
        %1497 = vmatprep.subr.mxu0 0.0
        %1498 = vmatpush1.msra.mxu0 0.0
        %1499 = vmatprep.subr.mxu0 0.0
        %1500 = vmatpush1.msra.mxu0 0.0
        %1501 = vmatprep.subr.mxu0 0.0
        %1502 = vmatpush1.msra.mxu0 0.0
        %1503 = vmatprep.subr.mxu0 0.0
        %1504 = vmatpush1.msra.mxu0 0.0
        %1505 = vmatprep.subr.mxu0 0.0
        %1506 = vmatpush1.msra.mxu0 0.0
        %1507 = vmatprep.subr.mxu0 0.0
        %1508 = vmatpush1.msra.mxu0 0.0
        %1509 = vmatprep.subr.mxu0 0.0
        %1510 = vmatpush1.msra.mxu0 0.0
        %1511 = vmatprep.subr.mxu0 0.0
        %1512 = vmatpush1.msra.mxu0 0.0
        %1513 = vmatprep.subr.mxu0 0.0
        %1514 = vmatpush1.msra.mxu0 0.0
        %1515 = vmatprep.subr.mxu0 0.0
        %1516 = vmatpush1.msra.mxu0 0.0
        %1517 = vmatprep.subr.mxu0 0.0
        %1518 = vmatpush1.msra.mxu0 0.0
        %1519 = vmatprep.subr.mxu0 0.0
        %1520 = vmatpush1.msra.mxu0 0.0
        %1521 = vmatprep.subr.mxu0 0.0
        %1522 = vmatpush1.msra.mxu0 0.0
        %1523 = vmatprep.mubr.f32.mxu0 0.0
        %1524 = vmatmul.mubr.f32.gmra.mrb[0].mxu0 %v1386
        %v1525 = vpop.f32.mrb[0].mxu0
        %v1526 = vadd.f32 %v1383, %v1525
        %v1527 = vpop.f32.mrb[0].mxu0
        %v1528 = vadd.f32 %v1383, %v1527
        %1529 = vdwg.mxu0
        %1530 = vmatprep.subr.mxu0 0.0
        %1531 = vmatpush1.msra.mxu0 %v1338
        %1532 = vmatprep.subr.mxu0 0.0
        %1533 = vmatpush1.msra.mxu0 %v1343
        %1534 = vmatprep.subr.mxu0 0.0
        %1535 = vmatpush1.msra.mxu0 %v1348
        %1536 = vmatprep.subr.mxu0 0.0
        %1537 = vmatpush1.msra.mxu0 %v1353
        %1538 = vmatprep.subr.mxu0 0.0
        %1539 = vmatpush1.msra.mxu0 %v1358
        %1540 = vmatprep.subr.mxu0 0.0
        %1541 = vmatpush1.msra.mxu0 %v1363
        %1542 = vmatprep.subr.mxu0 0.0
        %1543 = vmatpush1.msra.mxu0 %v1368
        %1544 = vmatprep.subr.mxu0 0.0
        %1545 = vmatpush1.msra.mxu0 %v1373
        %1546 = vmatprep.subr.mxu0 0.0
        %1547 = vmatpush1.msra.mxu0 %v1378
        %1548 = vmatprep.subr.mxu0 0.0
        %1549 = vmatpush1.msra.mxu0 0.0
        %1550 = vmatprep.subr.mxu0 0.0
        %1551 = vmatpush1.msra.mxu0 0.0
        %1552 = vmatprep.subr.mxu0 0.0
        %1553 = vmatpush1.msra.mxu0 0.0
        %1554 = vmatprep.subr.mxu0 0.0
        %1555 = vmatpush1.msra.mxu0 0.0
        %1556 = vmatprep.subr.mxu0 0.0
        %1557 = vmatpush1.msra.mxu0 0.0
        %1558 = vmatprep.subr.mxu0 0.0
        %1559 = vmatpush1.msra.mxu0 0.0
        %1560 = vmatprep.subr.mxu0 0.0
        %1561 = vmatpush1.msra.mxu0 0.0
        %1562 = vmatprep.subr.mxu0 0.0
        %1563 = vmatpush1.msra.mxu0 0.0
        %1564 = vmatprep.subr.mxu0 0.0
        %1565 = vmatpush1.msra.mxu0 0.0
        %1566 = vmatprep.subr.mxu0 0.0
        %1567 = vmatpush1.msra.mxu0 0.0
        %1568 = vmatprep.subr.mxu0 0.0
        %1569 = vmatpush1.msra.mxu0 0.0
        %1570 = vmatprep.subr.mxu0 0.0
        %1571 = vmatpush1.msra.mxu0 0.0
        %1572 = vmatprep.subr.mxu0 0.0
        %1573 = vmatpush1.msra.mxu0 0.0
        %1574 = vmatprep.subr.mxu0 0.0
        %1575 = vmatpush1.msra.mxu0 0.0
        %1576 = vmatprep.subr.mxu0 0.0
        %1577 = vmatpush1.msra.mxu0 0.0
        %1578 = vmatprep.subr.mxu0 0.0
        %1579 = vmatpush1.msra.mxu0 0.0
        %1580 = vmatprep.subr.mxu0 0.0
        %1581 = vmatpush1.msra.mxu0 0.0
        %1582 = vmatprep.subr.mxu0 0.0
        %1583 = vmatpush1.msra.mxu0 0.0
        %1584 = vmatprep.subr.mxu0 0.0
        %1585 = vmatpush1.msra.mxu0 0.0
        %1586 = vmatprep.subr.mxu0 0.0
        %1587 = vmatpush1.msra.mxu0 0.0
        %1588 = vmatprep.subr.mxu0 0.0
        %1589 = vmatpush1.msra.mxu0 0.0
        %1590 = vmatprep.subr.mxu0 0.0
        %1591 = vmatpush1.msra.mxu0 0.0
        %1592 = vmatprep.subr.mxu0 0.0
        %1593 = vmatpush1.msra.mxu0 0.0
        %1594 = vmatprep.mubr.f32.mxu0 0.0
        %1595 = vmatmul.mubr.f32.gmra.mrb[0].mxu0 %v1386
        %v1596 = vpop.f32.mrb[0].mxu0
        %v1597 = vadd.f32 %v1383, %v1596
        %v1598 = vpop.f32.mrb[0].mxu0
        %1599 = vdwg.mxu0
        %v1600 = vmax.f32 %v1455, 0.0
        %v1601 = vmax.f32 %v1457, 0.0
        %v1602 = vmax.f32 %v1526, 0.0
        %v1603 = vmax.f32 %v1528, 0.0
        %v1604 = vmax.f32 %v1597, 0.0
        %1605 = vst [vmem:[%s270] sm:$0xff] %v1600
        %1606 = vst [vmem:[%s270 + $0x8] sm:$0xff] %v1601
        %1607 = vst.msk [vmem:[%s270 + $0x10] sm:$0xff] %vm278, %v1602
        %1611 = vrot.lane.b32.xlu0 %v1602, 96
        %v1612 = vpop.permute.xlu0 %1611
        %1613 = vrot.lane.b32.xlu0 %v1603, 96
        %v1614 = vpop.permute.xlu0 %1613
        %1615 = vrot.lane.b32.xlu0 %v1604, 96
        %v1616 = vpop.permute.xlu0 %1615
        %vm1617 = vcmask 785408
        %v1618 = vsel %vm1617, %v1612, %v1614
        %v1619 = vsel %vm1617, %v1614, %v1616
        %s1623 = scalar_lea.vmem %s270, 24 [#allocation7]
        %1624 = vst [vmem:[%s1623] sm:$0xff] %v1618
        %1625 = vst [vmem:[%s1623 + $0x8] sm:$0xff] %v1619
        %1626 = vst.msk [vmem:[%s1623 + $0x10] sm:$0xff] %vm278, %v1616
        %s1627 = sand.u32 %s162, 1
        %s1628 = scalar_lea.sflag [#allocation6], %s1627
        %s1629 = sand.u32 %s162, 1
        %s1630 = smul.addr %s1629, 48
        %s1631 = scalar_lea.vmem [#allocation7], %s1630
        // Predicated region
        $region49: #{tpu_custom_call.1} parent=43 // pred_check
          %p1632 = pneg %p172
        $region50: #{tpu_custom_call.1} parent=43 // pred_check_branch
          %1634 = sbr.rel (%p1632) target = $region52
        $region51: #{tpu_custom_call.1} parent=43 // pred_region
          %s1635 = smul.u32 2, %s23
          %s1637 = ssub.s32 768, 768
          %1638 = vsyncadd %s1628, %s1637
          %s1639 = smul.addr %s1635, 3
          %s1640 = smul.addr %s1639, 128
          %s1641 = scalar_lea.hbm %s6, %s1640
          %s1642 = sshll.u32 %s1631, 4
          %s1643 = int_to_ptr.vmem [resolvable:$true] %s1642
          %1648 = dma.vmem_to_hbm [thread:$0]  %s1643, 768, %s1641, %s1628, 384, 384, 24
        $region52: #{tpu_custom_call.1} parent=43 // pred_fallthru
          _
      $region44: #{tpu_custom_call.1} parent=5 // pred_fallthru
        _
      %p1649 = scmp.le.s32.totalorder 2, %s18
      // Predicated region
      $region53: #{tpu_custom_call.1} parent=5 // pred_check
        %p1650 = pneg %p1649
      $region54: #{tpu_custom_call.1} parent=5 // pred_check_branch
        %1652 = sbr.rel (%p1650) target = $region56
      $region55: #{tpu_custom_call.1} parent=5 // pred_region
        %s1653 = ssub.s32 %s18, 2
        // Predicated region
        $region57: #{tpu_custom_call.1} parent=55 // pred_check
          %p1654 = pneg %p178
        $region58: #{tpu_custom_call.1} parent=55 // pred_check_branch
          %1656 = sbr.rel (%p1654) target = $region60
        $region59: #{tpu_custom_call.1} parent=55 // pred_region
          %s1657 = sand.u32 %s163, 1
          %s1658 = scalar_lea.sflag [#allocation6], %s1657
          %s1659 = sand.u32 %s163, 1
          %s1660 = smul.addr %s1659, 48
          %s1661 = scalar_lea.vmem [#allocation7], %s1660
          %1662 = dma.done %s1658, 768
        $region60: #{tpu_custom_call.1} parent=55 // pred_fallthru
          _
      $region56: #{tpu_custom_call.1} parent=5 // pred_fallthru
        _
    $region6: #{tpu_custom_call.1} parent=1 // loop_footer
      %s22 = sadd.s32 1, %s18
    $region7: #{tpu_custom_call.1} parent=1 // loop_footer_branch
      %17 = sbr.rel target = $region3
    $region8: #{tpu_custom_call.1} parent=1 // loop_exit
      _
    %1663 = vsyncpa [#allocation5], 1
    %s1664 = scalar_lea.sflag [#allocation5], 1
    %1665 = vsyncpa %s1664, 1
    %1666 = vsyncpa [#allocation6], 1
    %s1667 = scalar_lea.sflag [#allocation6], 1
    %1668 = vsyncpa %s1667, 1

</llo_original>
